<compile_context>
chip_gen: v6e
topology: v6e:2x2x1
jax: 0.10.0
libtpu: 0.0.40
codegen_flags: <defaults>
</compile_context>

<pallas_src>
import math
import functools

import jax
import jax.numpy as jnp
from jax import lax
from jax.experimental import pallas as pl
from jax.experimental.pallas import tpu as pltpu


# ----------------------------------------------------------------------------
# Kernel: one grid step = (batch b, query-tile qi, head h).
# Output projection accumulated over the (innermost, "arbitrary") head axis.
# ----------------------------------------------------------------------------
def _mha_kernel(*refs, scale, compute_dtype, has_mask):
    if has_mask:
        (q_ref, k_ref, v_ref,
         wq_ref, wk_ref, wv_ref, wo_t_ref,
         bq_ref, bk_ref, bv_ref, bo_ref,
         mask_ref, out_ref, attn_ref, acc_ref) = refs
    else:
        (q_ref, k_ref, v_ref,
         wq_ref, wk_ref, wv_ref, wo_t_ref,
         bq_ref, bk_ref, bv_ref, bo_ref,
         out_ref, attn_ref, acc_ref) = refs
        mask_ref = None

    h = pl.program_id(2)
    num_h = pl.num_programs(2)
    Dh = bq_ref.shape[-1]
    row0 = pl.multiple_of(h * Dh, Dh)           # sublane-aligned per-head row offset

    ct = (((1,), (1,)), ((), ()))               # contract last dim of both (x @ W^T)

    xq = q_ref[0]                               # (Tq, D) compute_dtype
    xk = k_ref[0]                               # (S,  D)
    xv = v_ref[0]

    # Per-head weight rows of the resident [Dout, Din] weights (sublane slices).
    wq_h = wq_ref[pl.ds(row0, Dh), :]           # (Dh, D)
    wk_h = wk_ref[pl.ds(row0, Dh), :]
    wv_h = wv_ref[pl.ds(row0, Dh), :]

    # Per-head projections (f32 accumulation, f32 bias add).
    qh = lax.dot_general(xq, wq_h, ct, preferred_element_type=jnp.float32) + bq_ref[0]
    kh = lax.dot_general(xk, wk_h, ct, preferred_element_type=jnp.float32) + bk_ref[0]
    vh = lax.dot_general(xv, wv_h, ct, preferred_element_type=jnp.float32) + bv_ref[0]

    qh = (qh * scale).astype(compute_dtype)     # scale on q, not on the (Tq, S) scores
    kh = kh.astype(compute_dtype)
    vh = vh.astype(compute_dtype)

    # scores = q_h @ k_h^T  (contract Dh of both operands, no transpose)
    scores = lax.dot_general(qh, kh, ct, preferred_element_type=jnp.float32)   # (Tq, S)

    if has_mask:
        # masked_fill(mask == 0, -1e9) semantics (BlockSpec already picked the head).
        scores = jnp.where(mask_ref[0, 0] == 0.0, -1e9, scores)

    # Softmax in f32; reciprocal on EUP + 2 Newton steps (f32-accurate).
    m = jnp.max(scores, axis=-1, keepdims=True)
    e = jnp.exp(scores - m)
    s = jnp.sum(e, axis=-1, keepdims=True)
    r = pl.reciprocal(s, approx=True)
    r = r * (2.0 - s * r)
    r = r * (2.0 - s * r)
    attn = e * r
    # dropout(p=0.1) is identity in eval mode.
    attn_ref[0, 0] = attn.astype(attn_ref.dtype)

    ctx = jnp.dot(attn.astype(compute_dtype), vh,
                  preferred_element_type=jnp.float32)                 # (Tq, Dh)

    # Output projection accumulated per head: out += ctx_h @ wo^T[h*Dh:(h+1)*Dh, :]
    wo_h = wo_t_ref[pl.ds(row0, Dh), :]                               # (Dh, D)

    @pl.when(h == 0)
    def _():
        acc_ref[...] = jnp.zeros_like(acc_ref)

    acc_ref[...] += jnp.dot(ctx.astype(compute_dtype), wo_h,
                            preferred_element_type=jnp.float32)

    @pl.when(h == num_h - 1)
    def _():
        out_ref[0] = (acc_ref[...] + bo_ref[...]).astype(out_ref.dtype)


# ----------------------------------------------------------------------------
# Wrapper
# ----------------------------------------------------------------------------
def multi_head_attention(q, k, v, params, num_heads, mask=None,
                         compute_dtype=jnp.float32, attn_dtype=jnp.float32,
                         q_tile=None, vmem_budget_bytes=40 * (1 << 20)):
    """q, k, v: [B, S, d_model] -> (output [B, S, d_model], attn [B, H, S, S])."""
    B, S, D = q.shape
    Dh = D // num_heads
    assert Dh * num_heads == D
    out_dtype = q.dtype
    scale = 1.0 / math.sqrt(Dh)
    cd = jnp.dtype(compute_dtype).itemsize
    ab = jnp.dtype(attn_dtype).itemsize
    ob = jnp.dtype(out_dtype).itemsize

    # ---- mask: keep it UN-broadcast over heads -------------------------------
    has_mask = mask is not None
    mask_per_head = False
    mask_f = None
    if has_mask:
        mask_f = jnp.asarray(mask, jnp.float32)
        while mask_f.ndim < 4:
            mask_f = mask_f[None]
        mask_per_head = (mask_f.shape[1] == num_heads and num_heads > 1)
        Hm = num_heads if mask_per_head else 1
        mask_f = jnp.broadcast_to(mask_f, (B, Hm, S, S))

    # ---- weight residency / single-buffering decision ------------------------
    weight_bytes = 4 * D * D * cd
    use_single_buffer = hasattr(pl, "Buffered") and weight_bytes >= (4 << 20)

    def vmem_est(tq):
        est = 2 * tq * D * cd                        # q tile (double-buffered)
        est += 2 * 2 * S * D * cd                    # k, v full-S blocks
        est += (1 if use_single_buffer else 2) * weight_bytes
        est += 2 * 4 * max(Dh, 128) * 4              # biases (tiny, padded)
        if has_mask:
            est += 2 * tq * S * 4                    # mask tile
        est += 2 * tq * S * ab                       # attn tile
        est += 2 * tq * D * ob                       # out tile
        est += tq * D * 4                            # f32 accumulator scratch
        return est

    if q_tile is None:
        cands = [t for t in (512, 256, 128, 64, 32, 16, 8)
                 if t <= S and S % t == 0] or [S]
        q_tile = next((t for t in cands if vmem_est(t) <= vmem_budget_bytes), cands[-1])
    Tq = q_tile
    assert S % Tq == 0
    n_q = S // Tq
    est = vmem_est(Tq)

    # ---- operands (cast once in the wrapper) ----------------------------------
    qc = q.astype(compute_dtype)
    kc = k.astype(compute_dtype)
    vc = v.astype(compute_dtype)
    wq = params["wq"].astype(compute_dtype)          # native [Dout, Din]
    wk = params["wk"].astype(compute_dtype)
    wv = params["wv"].astype(compute_dtype)
    wo_t = params["wo"].T.astype(compute_dtype)      # pre-transposed once (wrapper)
    bq = params["bq"].reshape(num_heads, 1, Dh).astype(jnp.float32)
    bk = params["bk"].reshape(num_heads, 1, Dh).astype(jnp.float32)
    bv = params["bv"].reshape(num_heads, 1, Dh).astype(jnp.float32)
    bo = params["bo"].reshape(1, D).astype(jnp.float32)

    def resident(shape, imap):
        if use_single_buffer:
            return pl.BlockSpec(shape, imap, pipeline_mode=pl.Buffered(1))
        return pl.BlockSpec(shape, imap)

    in_specs = [
        pl.BlockSpec((1, Tq, D), lambda b, qi, h: (b, qi, 0)),    # q tile
        pl.BlockSpec((1, S, D),  lambda b, qi, h: (b, 0, 0)),     # k (full S)
        pl.BlockSpec((1, S, D),  lambda b, qi, h: (b, 0, 0)),     # v (full S)
        resident((D, D), lambda b, qi, h: (0, 0)),                # wq (resident)
        resident((D, D), lambda b, qi, h: (0, 0)),                # wk
        resident((D, D), lambda b, qi, h: (0, 0)),                # wv
        resident((D, D), lambda b, qi, h: (0, 0)),                # wo^T
        pl.BlockSpec((1, 1, Dh), lambda b, qi, h: (h, 0, 0)),     # bq (per head)
        pl.BlockSpec((1, 1, Dh), lambda b, qi, h: (h, 0, 0)),     # bk
        pl.BlockSpec((1, 1, Dh), lambda b, qi, h: (h, 0, 0)),     # bv
        pl.BlockSpec((1, D),     lambda b, qi, h: (0, 0)),        # bo
    ]
    inputs = [qc, kc, vc, wq, wk, wv, wo_t, bq, bk, bv, bo]

    if has_mask:
        if mask_per_head:
            in_specs.append(pl.BlockSpec((1, 1, Tq, S),
                                         lambda b, qi, h: (b, h, qi, 0)))
        else:
            in_specs.append(pl.BlockSpec((1, 1, Tq, S),
                                         lambda b, qi, h: (b, 0, qi, 0)))
        inputs.append(mask_f)

    kernel = functools.partial(_mha_kernel, scale=scale,
                               compute_dtype=compute_dtype, has_mask=has_mask)

    flops = B * (2 * S * D * D                    # q projection
                 + 2 * 2 * S * D * D * n_q        # k/v projections (per q tile)
                 + 4 * S * S * D                  # q·k^T + attn·v
                 + 2 * S * D * D)                 # out projection
    bytes_accessed = (3 * B * S * D * cd + 4 * D * D * cd + 4 * D * 4
                      + B * S * D * ob + B * num_heads * S * S * ab
                      + (B * (num_heads if mask_per_head else 1) * S * S * 4
                         if has_mask else 0))
    cost = pl.CostEstimate(flops=int(flops),
                           transcendentals=int(B * num_heads * S * S),
                           bytes_accessed=int(bytes_accessed))

    out, attn = pl.pallas_call(
        kernel,
        out_shape=(jax.ShapeDtypeStruct((B, S, D), out_dtype),
                   jax.ShapeDtypeStruct((B, num_heads, S, S), attn_dtype)),
        grid=(B, n_q, num_heads),
        in_specs=in_specs,
        out_specs=(pl.BlockSpec((1, Tq, D), lambda b, qi, h: (b, qi, 0)),
                   pl.BlockSpec((1, 1, Tq, S), lambda b, qi, h: (b, h, qi, 0))),
        scratch_shapes=[pltpu.VMEM((Tq, D), jnp.float32)],
        compiler_params=pltpu.CompilerParams(
            dimension_semantics=("parallel", "parallel", "arbitrary"),
            vmem_limit_bytes=int(min(max(2 * est, 32 << 20), 64 << 20))),
        cost_estimate=cost,
    )(*inputs)
    return out, attn


# ----------------------------------------------------------------------------
# Deterministic parameter init (mimics nn.Linear shapes: [Dout, Din] weights)
# ----------------------------------------------------------------------------
def init_params(key, d_model):
    keys = jax.random.split(key, 8)
    bound = 1.0 / math.sqrt(d_model)
    u = lambda kk, shape: jax.random.uniform(kk, shape, jnp.float32, -bound, bound)
    return {
        "wq": u(keys[0], (d_model, d_model)), "bq": u(keys[1], (d_model,)),
        "wk": u(keys[2], (d_model, d_model)), "bk": u(keys[3], (d_model,)),
        "wv": u(keys[4], (d_model, d_model)), "bv": u(keys[5], (d_model,)),
        "wo": u(keys[6], (d_model, d_model)), "bo": u(keys[7], (d_model,)),
    }


# ----------------------------------------------------------------------------
# Pure-JAX reference (mirrors the PyTorch module)
# ----------------------------------------------------------------------------
def reference_mha(q, k, v, params, num_heads, mask=None):
    B, S, D = q.shape
    Dh = D // num_heads
    lin = lambda x, w, b: x @ w.T + b
    qp = lin(q, params["wq"], params["bq"]).reshape(B, S, num_heads, Dh).transpose(0, 2, 1, 3)
    kp = lin(k, params["wk"], params["bk"]).reshape(B, S, num_heads, Dh).transpose(0, 2, 1, 3)
    vp = lin(v, params["wv"], params["bv"]).reshape(B, S, num_heads, Dh).transpose(0, 2, 1, 3)
    scores = jnp.einsum("bhqd,bhkd->bhqk", qp, kp) / math.sqrt(Dh)
    if mask is not None:
        scores = jnp.where(mask == 0, -1e9, scores)
    attn = jax.nn.softmax(scores, axis=-1)
    ctx = jnp.einsum("bhqk,bhkd->bhqd", attn, vp).transpose(0, 2, 1, 3).reshape(B, S, D)
    out = lin(ctx, params["wo"], params["bo"])
    return out, attn


if __name__ == "__main__":
    B, S, D, H = 2, 8, 32, 4   # batch, seq, d_model, num_heads  (head_dim = 8)

    key = jax.random.PRNGKey(0)
    kq, kk, kv, kp = jax.random.split(key, 4)
    q = jax.random.normal(kq, (B, S, D), jnp.float32)
    k = jax.random.normal(kk, (B, S, D), jnp.float32)
    v = jax.random.normal(kv, (B, S, D), jnp.float32)
    params = init_params(kp, D)

    # 1) f32, no mask — tight tolerance
    out, attn = multi_head_attention(q, k, v, params, num_heads=H)
    out = jax.block_until_ready(out)
    attn = jax.block_until_ready(attn)
    ref_out, ref_attn = reference_mha(q, k, v, params, num_heads=H)
    assert out.shape == (B, S, D) and attn.shape == (B, H, S, S)
    assert jnp.allclose(out, ref_out, atol=1e-4, rtol=1e-4)
    assert jnp.allclose(attn, ref_attn, atol=1e-5, rtol=1e-5)

    # 2) f32, causal mask (masked_fill(mask==0, -1e9) path, mask kept (B,1,S,S))
    mask = jnp.broadcast_to(jnp.tril(jnp.ones((S, S), jnp.float32))[None, None],
                            (B, 1, S, S))
    out_m, attn_m = multi_head_attention(q, k, v, params, num_heads=H, mask=mask)
    out_m = jax.block_until_ready(out_m)
    ref_out_m, ref_attn_m = reference_mha(q, k, v, params, num_heads=H, mask=mask)
    assert jnp.allclose(out_m, ref_out_m, atol=1e-4, rtol=1e-4)
    assert jnp.allclose(attn_m, ref_attn_m, atol=1e-5, rtol=1e-5)

    # 3) bf16 matmul operands (f32 accumulation / softmax) — looser tolerance
    out_bf, attn_bf = multi_head_attention(q, k, v, params, num_heads=H,
                                           compute_dtype=jnp.bfloat16)
    out_bf = jax.block_until_ready(out_bf)
    assert jnp.allclose(out_bf, ref_out, atol=5e-2, rtol=5e-2)
    assert jnp.allclose(attn_bf, ref_attn, atol=5e-2, rtol=5e-2)

    print("KERNEL_OK")
</pallas_src>

<mosaic_0001>
module attributes {stable_mosaic.version = 11 : i64} {
  func.func @_mha_kernel(%arg0: i32, %arg1: i32, %arg2: i32, %arg3: memref<1x8x32xf32, #tpu.memory_space<vmem>>, %arg4: memref<1x8x32xf32, #tpu.memory_space<vmem>>, %arg5: memref<1x8x32xf32, #tpu.memory_space<vmem>>, %arg6: memref<32x32xf32, #tpu.memory_space<vmem>>, %arg7: memref<32x32xf32, #tpu.memory_space<vmem>>, %arg8: memref<32x32xf32, #tpu.memory_space<vmem>>, %arg9: memref<32x32xf32, #tpu.memory_space<vmem>>, %arg10: memref<1x1x8xf32, #tpu.memory_space<vmem>>, %arg11: memref<1x1x8xf32, #tpu.memory_space<vmem>>, %arg12: memref<1x1x8xf32, #tpu.memory_space<vmem>>, %arg13: memref<1x32xf32, #tpu.memory_space<vmem>>, %arg14: memref<1x8x32xf32, #tpu.memory_space<vmem>>, %arg15: memref<1x1x8x8xf32, #tpu.memory_space<vmem>>, %arg16: memref<8x32xf32, #tpu.memory_space<vmem>>) attributes {dimension_semantics = [#tpu.dimension_semantics<parallel>, #tpu.dimension_semantics<parallel>, #tpu.dimension_semantics<arbitrary>], iteration_bounds = array<i64: 2, 1, 4>, scalar_prefetch = 0 : i64, scratch_operands = 1 : i64, tpu.core_type = #tpu.core_type<tc>, window_params = [{transform_indices = @transform_0, window_bounds = array<i64: 1, 8, 32>}, {transform_indices = @transform_1, window_bounds = array<i64: 1, 8, 32>}, {transform_indices = @transform_2, window_bounds = array<i64: 1, 8, 32>}, {pipeline_mode = #tpu.pipeline_mode<synchronous>, transform_indices = @transform_3, window_bounds = array<i64: 32, 32>}, {pipeline_mode = #tpu.pipeline_mode<synchronous>, transform_indices = @transform_4, window_bounds = array<i64: 32, 32>}, {pipeline_mode = #tpu.pipeline_mode<synchronous>, transform_indices = @transform_5, window_bounds = array<i64: 32, 32>}, {pipeline_mode = #tpu.pipeline_mode<synchronous>, transform_indices = @transform_6, window_bounds = array<i64: 32, 32>}, {transform_indices = @transform_7, window_bounds = array<i64: 1, 1, 8>}, {transform_indices = @transform_8, window_bounds = array<i64: 1, 1, 8>}, {transform_indices = @transform_9, window_bounds = array<i64: 1, 1, 8>}, {pipeline_mode = #tpu.pipeline_mode<synchronous>, transform_indices = @transform_10, window_bounds = array<i64: 1, 32>}, {transform_indices = @transform_11, window_bounds = array<i64: 1, 8, 32>}, {transform_indices = @transform_12, window_bounds = array<i64: 1, 1, 8, 8>}]} {
    %c8_i32 = arith.constant 8 : i32
    %0 = arith.muli %arg2, %c8_i32 : i32
    %1 = tpu.assume_multiple %0, 8 : i32
    %c0 = arith.constant 0 : index
    %c0_0 = arith.constant 0 : index
    %c0_1 = arith.constant 0 : index
    %2 = vector.load %arg3[%c0, %c0_0, %c0_1] : memref<1x8x32xf32, #tpu.memory_space<vmem>>, vector<1x8x32xf32>
    %3 = vector.shape_cast %2 : vector<1x8x32xf32> to vector<8x32xf32>
    %c0_2 = arith.constant 0 : index
    %c0_3 = arith.constant 0 : index
    %c0_4 = arith.constant 0 : index
    %4 = vector.load %arg4[%c0_2, %c0_3, %c0_4] : memref<1x8x32xf32, #tpu.memory_space<vmem>>, vector<1x8x32xf32>
    %5 = vector.shape_cast %4 : vector<1x8x32xf32> to vector<8x32xf32>
    %c0_5 = arith.constant 0 : index
    %c0_6 = arith.constant 0 : index
    %c0_7 = arith.constant 0 : index
    %6 = vector.load %arg5[%c0_5, %c0_6, %c0_7] : memref<1x8x32xf32, #tpu.memory_space<vmem>>, vector<1x8x32xf32>
    %7 = vector.shape_cast %6 : vector<1x8x32xf32> to vector<8x32xf32>
    %8 = arith.index_cast %1 : i32 to index
    %c0_8 = arith.constant 0 : index
    %9 = vector.load %arg6[%8, %c0_8] : memref<32x32xf32, #tpu.memory_space<vmem>>, vector<8x32xf32>
    %10 = arith.index_cast %1 : i32 to index
    %c0_9 = arith.constant 0 : index
    %11 = vector.load %arg7[%10, %c0_9] : memref<32x32xf32, #tpu.memory_space<vmem>>, vector<8x32xf32>
    %12 = arith.index_cast %1 : i32 to index
    %c0_10 = arith.constant 0 : index
    %13 = vector.load %arg8[%12, %c0_10] : memref<32x32xf32, #tpu.memory_space<vmem>>, vector<8x32xf32>
    %cst = arith.constant dense<0.000000e+00> : vector<8x8xf32>
    %14 = tpu.matmul %3, %9, %cst {dimension_numbers = #tpu.dot_dimension_numbers<[1], [1], [0], [0], [0, 0, 1, 0], [], []>} : vector<8x32xf32>, vector<8x32xf32>, vector<8x8xf32> -> vector<8x8xf32>
    %c0_11 = arith.constant 0 : index
    %c0_12 = arith.constant 0 : index
    %c0_13 = arith.constant 0 : index
    %15 = vector.load %arg10[%c0_11, %c0_12, %c0_13] : memref<1x1x8xf32, #tpu.memory_space<vmem>>, vector<1x1x8xf32>
    %16 = vector.shape_cast %15 : vector<1x1x8xf32> to vector<1x8xf32>
    %17 = vector.broadcast %16 : vector<1x8xf32> to vector<8x8xf32>
    %18 = arith.addf %14, %17 : vector<8x8xf32>
    %cst_14 = arith.constant dense<0.000000e+00> : vector<8x8xf32>
    %19 = tpu.matmul %5, %11, %cst_14 {dimension_numbers = #tpu.dot_dimension_numbers<[1], [1], [0], [0], [0, 0, 1, 0], [], []>} : vector<8x32xf32>, vector<8x32xf32>, vector<8x8xf32> -> vector<8x8xf32>
    %c0_15 = arith.constant 0 : index
    %c0_16 = arith.constant 0 : index
    %c0_17 = arith.constant 0 : index
    %20 = vector.load %arg11[%c0_15, %c0_16, %c0_17] : memref<1x1x8xf32, #tpu.memory_space<vmem>>, vector<1x1x8xf32>
    %21 = vector.shape_cast %20 : vector<1x1x8xf32> to vector<1x8xf32>
    %22 = vector.broadcast %21 : vector<1x8xf32> to vector<8x8xf32>
    %23 = arith.addf %19, %22 : vector<8x8xf32>
    %cst_18 = arith.constant dense<0.000000e+00> : vector<8x8xf32>
    %24 = tpu.matmul %7, %13, %cst_18 {dimension_numbers = #tpu.dot_dimension_numbers<[1], [1], [0], [0], [0, 0, 1, 0], [], []>} : vector<8x32xf32>, vector<8x32xf32>, vector<8x8xf32> -> vector<8x8xf32>
    %c0_19 = arith.constant 0 : index
    %c0_20 = arith.constant 0 : index
    %c0_21 = arith.constant 0 : index
    %25 = vector.load %arg12[%c0_19, %c0_20, %c0_21] : memref<1x1x8xf32, #tpu.memory_space<vmem>>, vector<1x1x8xf32>
    %26 = vector.shape_cast %25 : vector<1x1x8xf32> to vector<1x8xf32>
    %27 = vector.broadcast %26 : vector<1x8xf32> to vector<8x8xf32>
    %28 = arith.addf %24, %27 : vector<8x8xf32>
    %cst_22 = arith.constant 0.353553385 : f32
    %29 = vector.broadcast %cst_22 : f32 to vector<8x8xf32>
    %30 = arith.mulf %18, %29 : vector<8x8xf32>
    %cst_23 = arith.constant dense<0.000000e+00> : vector<8x8xf32>
    %31 = tpu.matmul %30, %23, %cst_23 {dimension_numbers = #tpu.dot_dimension_numbers<[1], [1], [0], [0], [0, 0, 1, 0], [], []>} : vector<8x8xf32>, vector<8x8xf32>, vector<8x8xf32> -> vector<8x8xf32>
    %cst_24 = arith.constant dense<0xFF800000> : vector<8xf32>
    %32 = vector.multi_reduction <maximumf>, %31, %cst_24 [1] : vector<8x8xf32> to vector<8xf32>
    %33 = vector.shape_cast %32 : vector<8xf32> to vector<8x1xf32>
    %34 = vector.broadcast %33 : vector<8x1xf32> to vector<8x8xf32>
    %35 = arith.subf %31, %34 : vector<8x8xf32>
    %36 = math.exp %35 : vector<8x8xf32>
    %cst_25 = arith.constant dense<0.000000e+00> : vector<8xf32>
    %37 = vector.multi_reduction <add>, %36, %cst_25 [1] : vector<8x8xf32> to vector<8xf32>
    %38 = vector.shape_cast %37 : vector<8xf32> to vector<8x1xf32>
    %39 = tpu.reciprocal %38 {approx = true} : vector<8x1xf32> -> vector<8x1xf32>
    %40 = arith.mulf %38, %39 : vector<8x1xf32>
    %cst_26 = arith.constant 2.000000e+00 : f32
    %41 = vector.broadcast %cst_26 : f32 to vector<8x1xf32>
    %42 = arith.subf %41, %40 : vector<8x1xf32>
    %43 = arith.mulf %39, %42 : vector<8x1xf32>
    %44 = arith.mulf %38, %43 : vector<8x1xf32>
    %cst_27 = arith.constant 2.000000e+00 : f32
    %45 = vector.broadcast %cst_27 : f32 to vector<8x1xf32>
    %46 = arith.subf %45, %44 : vector<8x1xf32>
    %47 = arith.mulf %43, %46 : vector<8x1xf32>
    %48 = vector.broadcast %47 : vector<8x1xf32> to vector<8x8xf32>
    %49 = arith.mulf %36, %48 : vector<8x8xf32>
    %c0_28 = arith.constant 0 : index
    %c0_29 = arith.constant 0 : index
    %c0_30 = arith.constant 0 : index
    %c0_31 = arith.constant 0 : index
    %50 = vector.load %arg15[%c0_28, %c0_29, %c0_30, %c0_31] : memref<1x1x8x8xf32, #tpu.memory_space<vmem>>, vector<1x1x8x8xf32>
    %51 = vector.shape_cast %50 : vector<1x1x8x8xf32> to vector<8x8xf32>
    %52 = vector.shape_cast %49 : vector<8x8xf32> to vector<1x1x8x8xf32>
    tpu.vector_store %arg15[%c0_28, %c0_29, %c0_30, %c0_31], %52 {strides = array<i32>} : memref<1x1x8x8xf32, #tpu.memory_space<vmem>>, vector<1x1x8x8xf32>,
    %cst_32 = arith.constant dense<0.000000e+00> : vector<8x8xf32>
    %53 = tpu.matmul %49, %28, %cst_32 {dimension_numbers = #tpu.dot_dimension_numbers<[1], [0], [0], [1], [0, 0, 1, 1], [], []>} : vector<8x8xf32>, vector<8x8xf32>, vector<8x8xf32> -> vector<8x8xf32>
    %54 = arith.index_cast %1 : i32 to index
    %c0_33 = arith.constant 0 : index
    %55 = vector.load %arg9[%54, %c0_33] : memref<32x32xf32, #tpu.memory_space<vmem>>, vector<8x32xf32>
    %c0_i32 = arith.constant 0 : i32
    %56 = arith.cmpi eq, %arg2, %c0_i32 : i32
    %57 = arith.extui %56 : i1 to i32
    %c0_i32_34 = arith.constant 0 : i32
    %58 = arith.cmpi ne, %57, %c0_i32_34 : i32
    scf.if %58 {
      %cst_41 = arith.constant 0.000000e+00 : f32
      %66 = vector.broadcast %cst_41 : f32 to vector<8x32xf32>
      %c0_42 = arith.constant 0 : index
      %c0_43 = arith.constant 0 : index
      %67 = vector.load %arg16[%c0_42, %c0_43] : memref<8x32xf32, #tpu.memory_space<vmem>>, vector<8x32xf32>
      tpu.vector_store %arg16[%c0_42, %c0_43], %66 {strides = array<i32>} : memref<8x32xf32, #tpu.memory_space<vmem>>, vector<8x32xf32>,
    } else {
    }
    %c0_35 = arith.constant 0 : index
    %c0_36 = arith.constant 0 : index
    %59 = vector.load %arg16[%c0_35, %c0_36] : memref<8x32xf32, #tpu.memory_space<vmem>>, vector<8x32xf32>
    %cst_37 = arith.constant dense<0.000000e+00> : vector<8x32xf32>
    %60 = tpu.matmul %53, %55, %cst_37 {dimension_numbers = #tpu.dot_dimension_numbers<[1], [0], [0], [1], [0, 0, 1, 1], [], []>} : vector<8x8xf32>, vector<8x32xf32>, vector<8x32xf32> -> vector<8x32xf32>
    %61 = arith.addf %59, %60 : vector<8x32xf32>
    %c0_38 = arith.constant 0 : index
    %c0_39 = arith.constant 0 : index
    %62 = vector.load %arg16[%c0_38, %c0_39] : memref<8x32xf32, #tpu.memory_space<vmem>>, vector<8x32xf32>
    tpu.vector_store %arg16[%c0_38, %c0_39], %61 {strides = array<i32>} : memref<8x32xf32, #tpu.memory_space<vmem>>, vector<8x32xf32>,
    %c3_i32 = arith.constant 3 : i32
    %63 = arith.cmpi eq, %arg2, %c3_i32 : i32
    %64 = arith.extui %63 : i1 to i32
    %c0_i32_40 = arith.constant 0 : i32
    %65 = arith.cmpi ne, %64, %c0_i32_40 : i32
    scf.if %65 {
      %c0_41 = arith.constant 0 : index
      %c0_42 = arith.constant 0 : index
      %66 = vector.load %arg16[%c0_41, %c0_42] : memref<8x32xf32, #tpu.memory_space<vmem>>, vector<8x32xf32>
      %c0_43 = arith.constant 0 : index
      %c0_44 = arith.constant 0 : index
      %67 = vector.load %arg13[%c0_43, %c0_44] : memref<1x32xf32, #tpu.memory_space<vmem>>, vector<1x32xf32>
      %68 = vector.broadcast %67 : vector<1x32xf32> to vector<8x32xf32>
      %69 = arith.addf %66, %68 : vector<8x32xf32>
      %c0_45 = arith.constant 0 : index
      %c0_46 = arith.constant 0 : index
      %c0_47 = arith.constant 0 : index
      %70 = vector.load %arg14[%c0_45, %c0_46, %c0_47] : memref<1x8x32xf32, #tpu.memory_space<vmem>>, vector<1x8x32xf32>
      %71 = vector.shape_cast %70 : vector<1x8x32xf32> to vector<8x32xf32>
      %72 = vector.shape_cast %69 : vector<8x32xf32> to vector<1x8x32xf32>
      tpu.vector_store %arg14[%c0_45, %c0_46, %c0_47], %72 {strides = array<i32>} : memref<1x8x32xf32, #tpu.memory_space<vmem>>, vector<1x8x32xf32>,
    } else {
    }
    return
  }
  func.func @transform_0(%arg0: i32, %arg1: i32, %arg2: i32) -> (i32, i32, i32) {
    %c0_i32 = arith.constant 0 : i32
    %c0_i32_0 = arith.constant 0 : i32
    return %arg0, %arg1, %c0_i32 : i32, i32, i32
  }
  func.func @transform_1(%arg0: i32, %arg1: i32, %arg2: i32) -> (i32, i32, i32) {
    %c0_i32 = arith.constant 0 : i32
    %c0_i32_0 = arith.constant 0 : i32
    %c0_i32_1 = arith.constant 0 : i32
    return %arg0, %c0_i32, %c0_i32_0 : i32, i32, i32
  }
  func.func @transform_2(%arg0: i32, %arg1: i32, %arg2: i32) -> (i32, i32, i32) {
    %c0_i32 = arith.constant 0 : i32
    %c0_i32_0 = arith.constant 0 : i32
    %c0_i32_1 = arith.constant 0 : i32
    return %arg0, %c0_i32, %c0_i32_0 : i32, i32, i32
  }
  func.func @transform_3(%arg0: i32, %arg1: i32, %arg2: i32) -> (i32, i32) {
    %c0_i32 = arith.constant 0 : i32
    %c0_i32_0 = arith.constant 0 : i32
    %c0_i32_1 = arith.constant 0 : i32
    return %c0_i32, %c0_i32_0 : i32, i32
  }
  func.func @transform_4(%arg0: i32, %arg1: i32, %arg2: i32) -> (i32, i32) {
    %c0_i32 = arith.constant 0 : i32
    %c0_i32_0 = arith.constant 0 : i32
    %c0_i32_1 = arith.constant 0 : i32
    return %c0_i32, %c0_i32_0 : i32, i32
  }
  func.func @transform_5(%arg0: i32, %arg1: i32, %arg2: i32) -> (i32, i32) {
    %c0_i32 = arith.constant 0 : i32
    %c0_i32_0 = arith.constant 0 : i32
    %c0_i32_1 = arith.constant 0 : i32
    return %c0_i32, %c0_i32_0 : i32, i32
  }
  func.func @transform_6(%arg0: i32, %arg1: i32, %arg2: i32) -> (i32, i32) {
    %c0_i32 = arith.constant 0 : i32
    %c0_i32_0 = arith.constant 0 : i32
    %c0_i32_1 = arith.constant 0 : i32
    return %c0_i32, %c0_i32_0 : i32, i32
  }
  func.func @transform_7(%arg0: i32, %arg1: i32, %arg2: i32) -> (i32, i32, i32) {
    %c0_i32 = arith.constant 0 : i32
    %c0_i32_0 = arith.constant 0 : i32
    %c0_i32_1 = arith.constant 0 : i32
    return %arg2, %c0_i32, %c0_i32_0 : i32, i32, i32
  }
  func.func @transform_8(%arg0: i32, %arg1: i32, %arg2: i32) -> (i32, i32, i32) {
    %c0_i32 = arith.constant 0 : i32
    %c0_i32_0 = arith.constant 0 : i32
    %c0_i32_1 = arith.constant 0 : i32
    return %arg2, %c0_i32, %c0_i32_0 : i32, i32, i32
  }
  func.func @transform_9(%arg0: i32, %arg1: i32, %arg2: i32) -> (i32, i32, i32) {
    %c0_i32 = arith.constant 0 : i32
    %c0_i32_0 = arith.constant 0 : i32
    %c0_i32_1 = arith.constant 0 : i32
    return %arg2, %c0_i32, %c0_i32_0 : i32, i32, i32
  }
  func.func @transform_10(%arg0: i32, %arg1: i32, %arg2: i32) -> (i32, i32) {
    %c0_i32 = arith.constant 0 : i32
    %c0_i32_0 = arith.constant 0 : i32
    %c0_i32_1 = arith.constant 0 : i32
    return %c0_i32, %c0_i32_0 : i32, i32
  }
  func.func @transform_11(%arg0: i32, %arg1: i32, %arg2: i32) -> (i32, i32, i32) {
    %c0_i32 = arith.constant 0 : i32
    %c0_i32_0 = arith.constant 0 : i32
    return %arg0, %arg1, %c0_i32 : i32, i32, i32
  }
  func.func @transform_12(%arg0: i32, %arg1: i32, %arg2: i32) -> (i32, i32, i32, i32) {
    %c0_i32 = arith.constant 0 : i32
    %c0_i32_0 = arith.constant 0 : i32
    return %arg0, %arg2, %arg1, %c0_i32 : i32, i32, i32, i32
  }
}

</mosaic_0001>

<llo_original>
// kernel: tpu_custom_call.1
$region0: #{tpu_custom_call.1}
  #allocation0 [shape = 'u32[]', space=smem, size = 0x4, offset = 0x4, fixed_abs, tag = 'smem constant byte address 0x4 - core index']
  #allocation1 [shape = 'u32[144,128]{1,0:T(1,128)}', space=vmem, size = 0x12000, scoped, tag = 'internal scratch']
  #allocation2 [shape = 'f32[8,32]{1,0:T(8,128)}', space=vmem, size = 0x1000, scoped, tag = 'scratch operand']
  %s0 = inlined_call_operand.hbm [shape: f32[2,8,32], index: 0, kind: input, shape index: {}]
  %s1 = inlined_call_operand.hbm [shape: f32[2,8,32], index: 1, kind: input, shape index: {}]
  %s2 = inlined_call_operand.hbm [shape: f32[2,8,32], index: 2, kind: input, shape index: {}]
  %s3 = inlined_call_operand.hbm [shape: f32[32,32], index: 3, kind: input, shape index: {}]
  %s4 = inlined_call_operand.hbm [shape: f32[32,32], index: 4, kind: input, shape index: {}]
  %s5 = inlined_call_operand.hbm [shape: f32[32,32], index: 5, kind: input, shape index: {}]
  %s6 = inlined_call_operand.hbm [shape: f32[32,32], index: 6, kind: input, shape index: {}]
  %s7 = inlined_call_operand.vmem [shape: f32[4,1,8], index: 7, kind: input, shape index: {}]
  %s8 = inlined_call_operand.vmem [shape: f32[4,1,8], index: 8, kind: input, shape index: {}]
  %s9 = inlined_call_operand.vmem [shape: f32[4,1,8], index: 9, kind: input, shape index: {}]
  %s10 = inlined_call_operand.vmem [shape: f32[1,32], index: 10, kind: input, shape index: {}]
  %s11 = inlined_call_operand.hbm [shape: f32[2,8,32], index: 11, kind: output, shape index: {0}]
  %s12 = inlined_call_operand.hbm [shape: f32[2,4,8,8], index: 12, kind: output, shape index: {1}]
  %13 = xla_tuple %s11, %s12
  %s14 = sld [smem:[#allocation0]]
  $region121: #{tpu_custom_call.1} parent=0
    _
  %s16 = ssub.s32 1, %s14
  %s17 = scalar_select 0, %s16, %s14
  $region1: #{tpu_custom_call.1} parent=0
    #allocation3 [shape = 'u8[8192]{0}', space=vmem, size = 0x2000, scoped, tag = 'input window, operand 0']
    #allocation4 [shape = 's32[2]{0}', space=sflag, size = 0x8, scoped, tag = 'scoped memory for tpu_custom_call.1']
    #allocation5 [shape = 's32[2]{0}', space=sflag, size = 0x8, scoped, tag = 'scoped memory for tpu_custom_call.1']
    #allocation6 [shape = 'u8[8192]{0}', space=vmem, size = 0x2000, scoped, tag = 'input window, operand 1']
    #allocation7 [shape = 's32[2]{0}', space=sflag, size = 0x8, scoped, tag = 'scoped memory for tpu_custom_call.1']
    #allocation8 [shape = 'u8[8192]{0}', space=vmem, size = 0x2000, scoped, tag = 'input window, operand 2']
    #allocation9 [shape = 'u8[16384]{0}', space=vmem, size = 0x4000, scoped, tag = 'input window, operand 3, single buffered']
    #allocation10 [shape = 's32[1]{0}', space=sflag, size = 0x4, scoped, tag = 'scoped memory for tpu_custom_call.1']
    #allocation11 [shape = 'u8[16384]{0}', space=vmem, size = 0x4000, scoped, tag = 'input window, operand 4, single buffered']
    #allocation12 [shape = 'u8[16384]{0}', space=vmem, size = 0x4000, scoped, tag = 'input window, operand 5, single buffered']
    #allocation13 [shape = 's32[1]{0}', space=sflag, size = 0x4, scoped, tag = 'scoped memory for tpu_custom_call.1']
    #allocation14 [shape = 'u8[16384]{0}', space=vmem, size = 0x4000, scoped, tag = 'input window, operand 6, single buffered']
    #allocation15 [shape = 'u8[8192]{0}', space=vmem, size = 0x2000, scoped, tag = 'output window, operand 0']
    #allocation16 [shape = 'u8[8192]{0}', space=vmem, size = 0x2000, scoped, tag = 'output window, operand 1']
    #allocation17 [shape = 's32[2]{0}', space=sflag, size = 0x8, scoped, tag = 'scoped memory for tpu_custom_call.1']
    %18 = vsyncpa [#allocation4], 0
    %s19 = scalar_lea.sflag [#allocation4], 1
    %20 = vsyncpa %s19, 0
    %21 = vsyncpa [#allocation7], 0
    %s22 = scalar_lea.sflag [#allocation7], 1
    %23 = vsyncpa %s22, 0
    %24 = vsyncpa [#allocation10], 0
    %25 = vsyncpa [#allocation13], 0
    %26 = vsyncpa [#allocation5], 0
    %s27 = scalar_lea.sflag [#allocation5], 1
    %28 = vsyncpa %s27, 0
    %29 = vsyncpa [#allocation17], 0
    %s30 = scalar_lea.sflag [#allocation17], 1
    %31 = vsyncpa %s30, 0
    loop: start=0, step=1, limit=10
    $region2: #{tpu_custom_call.1} parent=1 // loop_pre_header
      _
    $region3: #{tpu_custom_call.1} parent=1 // loop_header
      %s33 = sphi 0, %s37
      %p34 = scmp.ge.s32.totalorder %s33, 10
      %s40 = sphi 0, %s59
      %s41 = sphi 0, %s55
      %s42 = sphi 0, %s51
      %s43 = sphi 0, %s40
      %s44 = sphi 0, %s41
      %s45 = sphi 0, %s42
      %s46 = sphi 0, %s43
      %s47 = sphi 0, %s44
      %s48 = sphi 0, %s45
      %s64 = sphi 0, %s66
      %s67 = sphi 0, %s64
      %s68 = sphi 0, %s67
      %s84 = sphi 0, %s68
      %s90 = sphi 0, %s92
      %s93 = sphi 0, %s90
      %s94 = sphi 0, %s93
      %s110 = sphi 0, %s94
      %s116 = sphi 0, %s118
      %s119 = sphi 0, %s116
      %s120 = sphi 0, %s119
      %s136 = sphi 0, %s120
      %s140 = sphi 0, %s140
      %s142 = sphi 0, %s140
      %s143 = sphi 0, %s142
      %s157 = sphi 0, %s143
      %s161 = sphi 0, %s161
      %s163 = sphi 0, %s161
      %s164 = sphi 0, %s163
      %s178 = sphi 0, %s164
      %s182 = sphi 0, %s182
      %s184 = sphi 0, %s182
      %s185 = sphi 0, %s184
      %s199 = sphi 0, %s185
      %s203 = sphi 0, %s203
      %s205 = sphi 0, %s203
      %s206 = sphi 0, %s205
      %s220 = sphi 0, %s206
      %s226 = sphi 0, %s228
      %s229 = sphi 0, %s226
      %s230 = sphi 0, %s229
      %s246 = sphi 0, %s230
      %s252 = sphi 0, %s254
      %s255 = sphi 0, %s252
      %s256 = sphi 0, %s255
      %s272 = sphi 0, %s256
      %s278 = sphi 0, %s280
      %s281 = sphi 0, %s278
      %s282 = sphi 0, %s281
      %s298 = sphi 0, %s282
      %s302 = sphi 0, %s302
      %s304 = sphi 0, %s302
      %s305 = sphi 0, %s304
      %s319 = sphi 0, %s305
      %s327 = sphi 0, %s329
      %s330 = sphi 0, %s327
      %s331 = sphi 0, %s330
      %s347 = sphi 0, %s331
      %s357 = sphi 0, %s359
      %s360 = sphi 0, %s357
      %s361 = sphi 0, %s360
      %s377 = sphi 0, %s361
    $region4: #{tpu_custom_call.1} parent=1 // loop_header_branch
      %36 = sbr.rel (%p34) target = $region8
    $region5: #{tpu_custom_call.1} parent=1 // loop_body
      %s38 = ssub.s32 %s33, 1
      %s39 = ssub.s32 %s33, 2
      %s49 = sadd.s32 1, %s42
      %p50 = scmp.ge.s32.totalorder %s49, 4
      %s51 = scalar_select %p50, 0, %s49
      %s52 = sadd.s32 1, %s41
      %s53 = scalar_select %p50, %s52, %s41
      %p54 = scmp.ge.s32.totalorder %s53, 1
      %s55 = scalar_select %p54, 0, %s53
      %s56 = sadd.s32 1, %s40
      %s57 = scalar_select %p54, %s56, %s40
      %p58 = scmp.ge.s32.totalorder %s57, 2
      %s59 = scalar_select %p58, 0, %s57
      %s60 = ssub.s32 %s40, %s59
      %s61 = ssub.s32 %s41, %s55
      %s62 = sor.u32 %s60, %s61
      %p63 = scmp.eq.s32.totalorder %s62, 0
      %s65 = sadd.s32 %s64, 1
      %s66 = scalar_select %p63, %s64, %s65
      %p69 = pneg %p63
      %p70 = scmp.eq.s32.totalorder %s33, 7
      %p71 = por %p69, %p70
      %p72 = scmp.ne.s32.totalorder %s64, %s67
      %p73 = scmp.eq.s32.totalorder %s33, 0
      %p74 = por %p72, %p73
      %p75 = scmp.ne.s32.totalorder %s64, %s67
      %p76 = scmp.eq.s32.totalorder %s38, 7
      %p77 = por %p75, %p76
      %p78 = scmp.ne.s32.totalorder %s67, %s68
      %p79 = scmp.eq.s32.totalorder %s38, 0
      %p80 = por %p78, %p79
      %p81 = scmp.ne.s32.totalorder %s67, %s68
      %p82 = scmp.eq.s32.totalorder %s39, 7
      %p83 = por %p81, %p82
      %p85 = scmp.ne.s32.totalorder %s68, %s84
      %p86 = scmp.eq.s32.totalorder %s39, 0
      %p87 = por %p85, %p86
      %s88 = ssub.s32 %s40, %s59
      %p89 = scmp.eq.s32.totalorder %s88, 0
      %s91 = sadd.s32 %s90, 1
      %s92 = scalar_select %p89, %s90, %s91
      %p95 = pneg %p89
      %p96 = scmp.eq.s32.totalorder %s33, 7
      %p97 = por %p95, %p96
      %p98 = scmp.ne.s32.totalorder %s90, %s93
      %p99 = scmp.eq.s32.totalorder %s33, 0
      %p100 = por %p98, %p99
      %p101 = scmp.ne.s32.totalorder %s90, %s93
      %p102 = scmp.eq.s32.totalorder %s38, 7
      %p103 = por %p101, %p102
      %p104 = scmp.ne.s32.totalorder %s93, %s94
      %p105 = scmp.eq.s32.totalorder %s38, 0
      %p106 = por %p104, %p105
      %p107 = scmp.ne.s32.totalorder %s93, %s94
      %p108 = scmp.eq.s32.totalorder %s39, 7
      %p109 = por %p107, %p108
      %p111 = scmp.ne.s32.totalorder %s94, %s110
      %p112 = scmp.eq.s32.totalorder %s39, 0
      %p113 = por %p111, %p112
      %s114 = ssub.s32 %s40, %s59
      %p115 = scmp.eq.s32.totalorder %s114, 0
      %s117 = sadd.s32 %s116, 1
      %s118 = scalar_select %p115, %s116, %s117
      %p121 = pneg %p115
      %p122 = scmp.eq.s32.totalorder %s33, 7
      %p123 = por %p121, %p122
      %p124 = scmp.ne.s32.totalorder %s116, %s119
      %p125 = scmp.eq.s32.totalorder %s33, 0
      %p126 = por %p124, %p125
      %p127 = scmp.ne.s32.totalorder %s116, %s119
      %p128 = scmp.eq.s32.totalorder %s38, 7
      %p129 = por %p127, %p128
      %p130 = scmp.ne.s32.totalorder %s119, %s120
      %p131 = scmp.eq.s32.totalorder %s38, 0
      %p132 = por %p130, %p131
      %p133 = scmp.ne.s32.totalorder %s119, %s120
      %p134 = scmp.eq.s32.totalorder %s39, 7
      %p135 = por %p133, %p134
      %p137 = scmp.ne.s32.totalorder %s120, %s136
      %p138 = scmp.eq.s32.totalorder %s39, 0
      %p139 = por %p137, %p138
      %s141 = sadd.s32 %s140, 1
      %p144 = scmp.eq.s32.totalorder %s33, 7
      %p145 = scmp.ne.s32.totalorder %s140, %s142
      %p146 = scmp.eq.s32.totalorder %s33, 0
      %p147 = por %p145, %p146
      %p148 = scmp.ne.s32.totalorder %s140, %s142
      %p149 = scmp.eq.s32.totalorder %s38, 7
      %p150 = por %p148, %p149
      %p151 = scmp.ne.s32.totalorder %s142, %s143
      %p152 = scmp.eq.s32.totalorder %s38, 0
      %p153 = por %p151, %p152
      %p154 = scmp.ne.s32.totalorder %s142, %s143
      %p155 = scmp.eq.s32.totalorder %s39, 7
      %p156 = por %p154, %p155
      %p158 = scmp.ne.s32.totalorder %s143, %s157
      %p159 = scmp.eq.s32.totalorder %s39, 0
      %p160 = por %p158, %p159
      %s162 = sadd.s32 %s161, 1
      %p165 = scmp.eq.s32.totalorder %s33, 7
      %p166 = scmp.ne.s32.totalorder %s161, %s163
      %p167 = scmp.eq.s32.totalorder %s33, 0
      %p168 = por %p166, %p167
      %p169 = scmp.ne.s32.totalorder %s161, %s163
      %p170 = scmp.eq.s32.totalorder %s38, 7
      %p171 = por %p169, %p170
      %p172 = scmp.ne.s32.totalorder %s163, %s164
      %p173 = scmp.eq.s32.totalorder %s38, 0
      %p174 = por %p172, %p173
      %p175 = scmp.ne.s32.totalorder %s163, %s164
      %p176 = scmp.eq.s32.totalorder %s39, 7
      %p177 = por %p175, %p176
      %p179 = scmp.ne.s32.totalorder %s164, %s178
      %p180 = scmp.eq.s32.totalorder %s39, 0
      %p181 = por %p179, %p180
      %s183 = sadd.s32 %s182, 1
      %p186 = scmp.eq.s32.totalorder %s33, 7
      %p187 = scmp.ne.s32.totalorder %s182, %s184
      %p188 = scmp.eq.s32.totalorder %s33, 0
      %p189 = por %p187, %p188
      %p190 = scmp.ne.s32.totalorder %s182, %s184
      %p191 = scmp.eq.s32.totalorder %s38, 7
      %p192 = por %p190, %p191
      %p193 = scmp.ne.s32.totalorder %s184, %s185
      %p194 = scmp.eq.s32.totalorder %s38, 0
      %p195 = por %p193, %p194
      %p196 = scmp.ne.s32.totalorder %s184, %s185
      %p197 = scmp.eq.s32.totalorder %s39, 7
      %p198 = por %p196, %p197
      %p200 = scmp.ne.s32.totalorder %s185, %s199
      %p201 = scmp.eq.s32.totalorder %s39, 0
      %p202 = por %p200, %p201
      %s204 = sadd.s32 %s203, 1
      %p207 = scmp.eq.s32.totalorder %s33, 7
      %p208 = scmp.ne.s32.totalorder %s203, %s205
      %p209 = scmp.eq.s32.totalorder %s33, 0
      %p210 = por %p208, %p209
      %p211 = scmp.ne.s32.totalorder %s203, %s205
      %p212 = scmp.eq.s32.totalorder %s38, 7
      %p213 = por %p211, %p212
      %p214 = scmp.ne.s32.totalorder %s205, %s206
      %p215 = scmp.eq.s32.totalorder %s38, 0
      %p216 = por %p214, %p215
      %p217 = scmp.ne.s32.totalorder %s205, %s206
      %p218 = scmp.eq.s32.totalorder %s39, 7
      %p219 = por %p217, %p218
      %p221 = scmp.ne.s32.totalorder %s206, %s220
      %p222 = scmp.eq.s32.totalorder %s39, 0
      %p223 = por %p221, %p222
      %s224 = ssub.s32 %s42, %s51
      %p225 = scmp.eq.s32.totalorder %s224, 0
      %s227 = sadd.s32 %s226, 1
      %s228 = scalar_select %p225, %s226, %s227
      %p231 = pneg %p225
      %p232 = scmp.eq.s32.totalorder %s33, 7
      %p233 = por %p231, %p232
      %p234 = scmp.ne.s32.totalorder %s226, %s229
      %p235 = scmp.eq.s32.totalorder %s33, 0
      %p236 = por %p234, %p235
      %p237 = scmp.ne.s32.totalorder %s226, %s229
      %p238 = scmp.eq.s32.totalorder %s38, 7
      %p239 = por %p237, %p238
      %p240 = scmp.ne.s32.totalorder %s229, %s230
      %p241 = scmp.eq.s32.totalorder %s38, 0
      %p242 = por %p240, %p241
      %p243 = scmp.ne.s32.totalorder %s229, %s230
      %p244 = scmp.eq.s32.totalorder %s39, 7
      %p245 = por %p243, %p244
      %p247 = scmp.ne.s32.totalorder %s230, %s246
      %p248 = scmp.eq.s32.totalorder %s39, 0
      %p249 = por %p247, %p248
      %s250 = ssub.s32 %s42, %s51
      %p251 = scmp.eq.s32.totalorder %s250, 0
      %s253 = sadd.s32 %s252, 1
      %s254 = scalar_select %p251, %s252, %s253
      %p257 = pneg %p251
      %p258 = scmp.eq.s32.totalorder %s33, 7
      %p259 = por %p257, %p258
      %p260 = scmp.ne.s32.totalorder %s252, %s255
      %p261 = scmp.eq.s32.totalorder %s33, 0
      %p262 = por %p260, %p261
      %p263 = scmp.ne.s32.totalorder %s252, %s255
      %p264 = scmp.eq.s32.totalorder %s38, 7
      %p265 = por %p263, %p264
      %p266 = scmp.ne.s32.totalorder %s255, %s256
      %p267 = scmp.eq.s32.totalorder %s38, 0
      %p268 = por %p266, %p267
      %p269 = scmp.ne.s32.totalorder %s255, %s256
      %p270 = scmp.eq.s32.totalorder %s39, 7
      %p271 = por %p269, %p270
      %p273 = scmp.ne.s32.totalorder %s256, %s272
      %p274 = scmp.eq.s32.totalorder %s39, 0
      %p275 = por %p273, %p274
      %s276 = ssub.s32 %s42, %s51
      %p277 = scmp.eq.s32.totalorder %s276, 0
      %s279 = sadd.s32 %s278, 1
      %s280 = scalar_select %p277, %s278, %s279
      %p283 = pneg %p277
      %p284 = scmp.eq.s32.totalorder %s33, 7
      %p285 = por %p283, %p284
      %p286 = scmp.ne.s32.totalorder %s278, %s281
      %p287 = scmp.eq.s32.totalorder %s33, 0
      %p288 = por %p286, %p287
      %p289 = scmp.ne.s32.totalorder %s278, %s281
      %p290 = scmp.eq.s32.totalorder %s38, 7
      %p291 = por %p289, %p290
      %p292 = scmp.ne.s32.totalorder %s281, %s282
      %p293 = scmp.eq.s32.totalorder %s38, 0
      %p294 = por %p292, %p293
      %p295 = scmp.ne.s32.totalorder %s281, %s282
      %p296 = scmp.eq.s32.totalorder %s39, 7
      %p297 = por %p295, %p296
      %p299 = scmp.ne.s32.totalorder %s282, %s298
      %p300 = scmp.eq.s32.totalorder %s39, 0
      %p301 = por %p299, %p300
      %s303 = sadd.s32 %s302, 1
      %p306 = scmp.eq.s32.totalorder %s33, 7
      %p307 = scmp.ne.s32.totalorder %s302, %s304
      %p308 = scmp.eq.s32.totalorder %s33, 0
      %p309 = por %p307, %p308
      %p310 = scmp.ne.s32.totalorder %s302, %s304
      %p311 = scmp.eq.s32.totalorder %s38, 7
      %p312 = por %p310, %p311
      %p313 = scmp.ne.s32.totalorder %s304, %s305
      %p314 = scmp.eq.s32.totalorder %s38, 0
      %p315 = por %p313, %p314
      %p316 = scmp.ne.s32.totalorder %s304, %s305
      %p317 = scmp.eq.s32.totalorder %s39, 7
      %p318 = por %p316, %p317
      %p320 = scmp.ne.s32.totalorder %s305, %s319
      %p321 = scmp.eq.s32.totalorder %s39, 0
      %p322 = por %p320, %p321
      %s323 = ssub.s32 %s40, %s59
      %s324 = ssub.s32 %s41, %s55
      %s325 = sor.u32 %s323, %s324
      %p326 = scmp.eq.s32.totalorder %s325, 0
      %s328 = sadd.s32 %s327, 1
      %s329 = scalar_select %p326, %s327, %s328
      %p332 = pneg %p326
      %p333 = scmp.eq.s32.totalorder %s33, 7
      %p334 = por %p332, %p333
      %p335 = scmp.ne.s32.totalorder %s327, %s330
      %p336 = scmp.eq.s32.totalorder %s33, 0
      %p337 = por %p335, %p336
      %p338 = scmp.ne.s32.totalorder %s327, %s330
      %p339 = scmp.eq.s32.totalorder %s38, 7
      %p340 = por %p338, %p339
      %p341 = scmp.ne.s32.totalorder %s330, %s331
      %p342 = scmp.eq.s32.totalorder %s38, 0
      %p343 = por %p341, %p342
      %p344 = scmp.ne.s32.totalorder %s330, %s331
      %p345 = scmp.eq.s32.totalorder %s39, 7
      %p346 = por %p344, %p345
      %p348 = scmp.ne.s32.totalorder %s331, %s347
      %p349 = scmp.eq.s32.totalorder %s39, 0
      %p350 = por %p348, %p349
      %s351 = ssub.s32 %s40, %s59
      %s352 = ssub.s32 %s42, %s51
      %s353 = sor.u32 %s351, %s352
      %s354 = ssub.s32 %s41, %s55
      %s355 = sor.u32 %s353, %s354
      %p356 = scmp.eq.s32.totalorder %s355, 0
      %s358 = sadd.s32 %s357, 1
      %s359 = scalar_select %p356, %s357, %s358
      %p362 = pneg %p356
      %p363 = scmp.eq.s32.totalorder %s33, 7
      %p364 = por %p362, %p363
      %p365 = scmp.ne.s32.totalorder %s357, %s360
      %p366 = scmp.eq.s32.totalorder %s33, 0
      %p367 = por %p365, %p366
      %p368 = scmp.ne.s32.totalorder %s357, %s360
      %p369 = scmp.eq.s32.totalorder %s38, 7
      %p370 = por %p368, %p369
      %p371 = scmp.ne.s32.totalorder %s360, %s361
      %p372 = scmp.eq.s32.totalorder %s38, 0
      %p373 = por %p371, %p372
      %p374 = scmp.ne.s32.totalorder %s360, %s361
      %p375 = scmp.eq.s32.totalorder %s39, 7
      %p376 = por %p374, %p375
      %p378 = scmp.ne.s32.totalorder %s361, %s377
      %p379 = scmp.eq.s32.totalorder %s39, 0
      %p380 = por %p378, %p379
      %p381 = scmp.le.s32.totalorder 1, %s33
      %p382 = scmp.lt.s32.totalorder %s33, 9
      %p383 = pnand %p381, %p382
      %p384 = pneg %p383
      // Predicated region
      $region9: #{tpu_custom_call.1} parent=5 // pred_check
        _
      $region10: #{tpu_custom_call.1} parent=5 // pred_check_branch
        %386 = sbr.rel (%p383) target = $region12
      $region11: #{tpu_custom_call.1} parent=5 // pred_region
        %s387 = ssub.s32 %s33, 1
        // Predicated region
        $region13: #{tpu_custom_call.1} parent=11 // pred_check
          %p388 = pneg %p153
        $region14: #{tpu_custom_call.1} parent=11 // pred_check_branch
          %390 = sbr.rel (%p388) target = $region16
        $region15: #{tpu_custom_call.1} parent=11 // pred_region
          %s392 = ssub.s32 512, 512
          %393 = vsyncadd [#allocation10], %s392
          %s394 = sshll.u32 [#allocation9], 4
          %s395 = int_to_ptr.vmem [resolvable:$true] %s394
          %400 = dma.hbm_to_vmem [thread:$0]  %s3, 512, %s395, [#allocation10], 128, 128, 8
        $region16: #{tpu_custom_call.1} parent=11 // pred_fallthru
          _
        // Predicated region
        $region17: #{tpu_custom_call.1} parent=11 // pred_check
          %p401 = pneg %p174
        $region18: #{tpu_custom_call.1} parent=11 // pred_check_branch
          %403 = sbr.rel (%p401) target = $region20
        $region19: #{tpu_custom_call.1} parent=11 // pred_region
          %s405 = ssub.s32 512, 512
          %406 = vsyncadd [#allocation10], %s405
          %s407 = sshll.u32 [#allocation11], 4
          %s408 = int_to_ptr.vmem [resolvable:$true] %s407
          %413 = dma.hbm_to_vmem [thread:$0]  %s4, 512, %s408, [#allocation10], 128, 128, 8
        $region20: #{tpu_custom_call.1} parent=11 // pred_fallthru
          _
        // Predicated region
        $region21: #{tpu_custom_call.1} parent=11 // pred_check
          %p414 = pneg %p195
        $region22: #{tpu_custom_call.1} parent=11 // pred_check_branch
          %416 = sbr.rel (%p414) target = $region24
        $region23: #{tpu_custom_call.1} parent=11 // pred_region
          %s418 = ssub.s32 512, 512
          %419 = vsyncadd [#allocation13], %s418
          %s420 = sshll.u32 [#allocation12], 4
          %s421 = int_to_ptr.vmem [resolvable:$true] %s420
          %426 = dma.hbm_to_vmem [thread:$0]  %s5, 512, %s421, [#allocation13], 128, 128, 8
        $region24: #{tpu_custom_call.1} parent=11 // pred_fallthru
          _
        // Predicated region
        $region25: #{tpu_custom_call.1} parent=11 // pred_check
          %p427 = pneg %p216
        $region26: #{tpu_custom_call.1} parent=11 // pred_check_branch
          %429 = sbr.rel (%p427) target = $region28
        $region27: #{tpu_custom_call.1} parent=11 // pred_region
          %s431 = ssub.s32 512, 512
          %432 = vsyncadd [#allocation13], %s431
          %s433 = sshll.u32 [#allocation14], 4
          %s434 = int_to_ptr.vmem [resolvable:$true] %s433
          %439 = dma.hbm_to_vmem [thread:$0]  %s6, 512, %s434, [#allocation13], 128, 128, 8
        $region28: #{tpu_custom_call.1} parent=11 // pred_fallthru
          _
        // Predicated region
        $region29: #{tpu_custom_call.1} parent=11 // pred_check
          %p440 = pneg %p315
        $region30: #{tpu_custom_call.1} parent=11 // pred_check_branch
          %442 = sbr.rel (%p440) target = $region32
        $region31: #{tpu_custom_call.1} parent=11 // pred_region
          _
        $region32: #{tpu_custom_call.1} parent=11 // pred_fallthru
          _
      $region12: #{tpu_custom_call.1} parent=5 // pred_fallthru
        _
      %p443 = scmp.lt.s32.totalorder %s33, 8
      // Predicated region
      $region33: #{tpu_custom_call.1} parent=5 // pred_check
        %p444 = pneg %p443
      $region34: #{tpu_custom_call.1} parent=5 // pred_check_branch
        %446 = sbr.rel (%p444) target = $region36
      $region35: #{tpu_custom_call.1} parent=5 // pred_region
        // Predicated region
        $region37: #{tpu_custom_call.1} parent=35 // pred_check
          %p447 = pneg %p74
        $region38: #{tpu_custom_call.1} parent=35 // pred_check_branch
          %449 = sbr.rel (%p447) target = $region40
        $region39: #{tpu_custom_call.1} parent=35 // pred_region
          %s450 = sand.u32 %s64, 1
          %s451 = scalar_lea.sflag [#allocation4], %s450
          %s452 = sand.u32 %s64, 1
          %s453 = smul.addr %s452, 8
          %s454 = scalar_lea.vmem [#allocation3], %s453
          %s456 = ssub.s32 128, 128
          %457 = vsyncadd %s451, %s456
          %s458 = sadd.s32 %s41, %s40
          %s459 = smul.addr %s458, 128
          %s460 = scalar_lea.hbm %s0, %s459
          %s462 = sshll.u32 %s454, 4
          %s463 = int_to_ptr.vmem [resolvable:$true] %s462
          %465 = dma.hbm_to_vmem [thread:$0]  %s460, 128, %s463, %s451
        $region40: #{tpu_custom_call.1} parent=35 // pred_fallthru
          _
        // Predicated region
        $region41: #{tpu_custom_call.1} parent=35 // pred_check
          %p466 = pneg %p100
        $region42: #{tpu_custom_call.1} parent=35 // pred_check_branch
          %468 = sbr.rel (%p466) target = $region44
        $region43: #{tpu_custom_call.1} parent=35 // pred_region
          %s469 = sand.u32 %s33, 1
          %s470 = scalar_lea.sflag [#allocation7], %s469
          %s471 = sand.u32 %s90, 1
          %s472 = smul.addr %s471, 8
          %s473 = scalar_lea.vmem [#allocation6], %s472
          %s475 = ssub.s32 128, 128
          %476 = vsyncadd %s470, %s475
          %s477 = smul.addr %s40, 128
          %s478 = scalar_lea.hbm %s1, %s477
          %s480 = sshll.u32 %s473, 4
          %s481 = int_to_ptr.vmem [resolvable:$true] %s480
          %483 = dma.hbm_to_vmem [thread:$0]  %s478, 128, %s481, %s470
        $region44: #{tpu_custom_call.1} parent=35 // pred_fallthru
          _
        // Predicated region
        $region45: #{tpu_custom_call.1} parent=35 // pred_check
          %p484 = pneg %p126
        $region46: #{tpu_custom_call.1} parent=35 // pred_check_branch
          %486 = sbr.rel (%p484) target = $region48
        $region47: #{tpu_custom_call.1} parent=35 // pred_region
          %s487 = sand.u32 %s33, 1
          %s488 = scalar_lea.sflag [#allocation7], %s487
          %s489 = sand.u32 %s116, 1
          %s490 = smul.addr %s489, 8
          %s491 = scalar_lea.vmem [#allocation8], %s490
          %s493 = ssub.s32 128, 128
          %494 = vsyncadd %s488, %s493
          %s495 = smul.addr %s40, 128
          %s496 = scalar_lea.hbm %s2, %s495
          %s498 = sshll.u32 %s491, 4
          %s499 = int_to_ptr.vmem [resolvable:$true] %s498
          %501 = dma.hbm_to_vmem [thread:$0]  %s496, 128, %s499, %s488
        $region48: #{tpu_custom_call.1} parent=35 // pred_fallthru
          _
        // Predicated region
        $region49: #{tpu_custom_call.1} parent=35 // pred_check
          %p502 = pneg %p236
        $region50: #{tpu_custom_call.1} parent=35 // pred_check_branch
          %504 = sbr.rel (%p502) target = $region52
        $region51: #{tpu_custom_call.1} parent=35 // pred_region
          %p505 = scmp.lt.s32.totalorder %s42, 3
          %s506 = scalar_select %p505, %s42, 3
          %s507 = scalar_lea.vmem %s7, %s506
        $region52: #{tpu_custom_call.1} parent=35 // pred_fallthru
          _
        // Predicated region
        $region53: #{tpu_custom_call.1} parent=35 // pred_check
          %p508 = pneg %p262
        $region54: #{tpu_custom_call.1} parent=35 // pred_check_branch
          %510 = sbr.rel (%p508) target = $region56
        $region55: #{tpu_custom_call.1} parent=35 // pred_region
          %p511 = scmp.lt.s32.totalorder %s42, 3
          %s512 = scalar_select %p511, %s42, 3
          %s513 = scalar_lea.vmem %s8, %s512
        $region56: #{tpu_custom_call.1} parent=35 // pred_fallthru
          _
        // Predicated region
        $region57: #{tpu_custom_call.1} parent=35 // pred_check
          %p514 = pneg %p288
        $region58: #{tpu_custom_call.1} parent=35 // pred_check_branch
          %516 = sbr.rel (%p514) target = $region60
        $region59: #{tpu_custom_call.1} parent=35 // pred_region
          %p517 = scmp.lt.s32.totalorder %s42, 3
          %s518 = scalar_select %p517, %s42, 3
          %s519 = scalar_lea.vmem %s9, %s518
        $region60: #{tpu_custom_call.1} parent=35 // pred_fallthru
          _
      $region36: #{tpu_custom_call.1} parent=5 // pred_fallthru
        _
      %p520 = scmp.le.s32.totalorder 1, %s33
      %p521 = scmp.lt.s32.totalorder %s33, 9
      %p522 = pnand %p520, %p521
      %p523 = pneg %p522
      // Predicated region
      $region61: #{tpu_custom_call.1} parent=5 // pred_check
        _
      $region62: #{tpu_custom_call.1} parent=5 // pred_check_branch
        %525 = sbr.rel (%p522) target = $region64
      $region63: #{tpu_custom_call.1} parent=5 // pred_region
        %s526 = ssub.s32 %s33, 1
        %s527 = sand.u32 %s67, 1
        %s528 = scalar_lea.sflag [#allocation4], %s527
        %s529 = sand.u32 %s67, 1
        %s530 = smul.addr %s529, 8
        %s531 = scalar_lea.vmem [#allocation3], %s530
        // Predicated region
        $region65: #{tpu_custom_call.1} parent=63 // pred_check
          %p532 = pneg %p80
        $region66: #{tpu_custom_call.1} parent=63 // pred_check_branch
          %534 = sbr.rel (%p532) target = $region68
        $region67: #{tpu_custom_call.1} parent=63 // pred_region
          %535 = dma.done %s528, 128
        $region68: #{tpu_custom_call.1} parent=63 // pred_fallthru
          _
        %s536 = sand.u32 %s38, 1
        %s537 = scalar_lea.sflag [#allocation7], %s536
        %s538 = sand.u32 %s93, 1
        %s539 = smul.addr %s538, 8
        %s540 = scalar_lea.vmem [#allocation6], %s539
        // Predicated region
        $region69: #{tpu_custom_call.1} parent=63 // pred_check
          %p541 = pneg %p106
        $region70: #{tpu_custom_call.1} parent=63 // pred_check_branch
          %543 = sbr.rel (%p541) target = $region72
        $region71: #{tpu_custom_call.1} parent=63 // pred_region
          %544 = dma.done %s537, 128
        $region72: #{tpu_custom_call.1} parent=63 // pred_fallthru
          _
        %s545 = sand.u32 %s38, 1
        %s546 = scalar_lea.sflag [#allocation7], %s545
        %s547 = sand.u32 %s119, 1
        %s548 = smul.addr %s547, 8
        %s549 = scalar_lea.vmem [#allocation8], %s548
        // Predicated region
        $region73: #{tpu_custom_call.1} parent=63 // pred_check
          %p550 = pneg %p132
        $region74: #{tpu_custom_call.1} parent=63 // pred_check_branch
          %552 = sbr.rel (%p550) target = $region76
        $region75: #{tpu_custom_call.1} parent=63 // pred_region
          %553 = dma.done %s546, 128
        $region76: #{tpu_custom_call.1} parent=63 // pred_fallthru
          _
        // Predicated region
        $region77: #{tpu_custom_call.1} parent=63 // pred_check
          %p554 = pneg %p153
        $region78: #{tpu_custom_call.1} parent=63 // pred_check_branch
          %556 = sbr.rel (%p554) target = $region80
        $region79: #{tpu_custom_call.1} parent=63 // pred_region
          %557 = dma.done [#allocation10], 512
        $region80: #{tpu_custom_call.1} parent=63 // pred_fallthru
          _
        // Predicated region
        $region81: #{tpu_custom_call.1} parent=63 // pred_check
          %p558 = pneg %p174
        $region82: #{tpu_custom_call.1} parent=63 // pred_check_branch
          %560 = sbr.rel (%p558) target = $region84
        $region83: #{tpu_custom_call.1} parent=63 // pred_region
          %561 = dma.done [#allocation10], 512
        $region84: #{tpu_custom_call.1} parent=63 // pred_fallthru
          _
        // Predicated region
        $region85: #{tpu_custom_call.1} parent=63 // pred_check
          %p562 = pneg %p195
        $region86: #{tpu_custom_call.1} parent=63 // pred_check_branch
          %564 = sbr.rel (%p562) target = $region88
        $region87: #{tpu_custom_call.1} parent=63 // pred_region
          %565 = dma.done [#allocation13], 512
        $region88: #{tpu_custom_call.1} parent=63 // pred_fallthru
          _
        // Predicated region
        $region89: #{tpu_custom_call.1} parent=63 // pred_check
          %p566 = pneg %p216
        $region90: #{tpu_custom_call.1} parent=63 // pred_check_branch
          %568 = sbr.rel (%p566) target = $region92
        $region91: #{tpu_custom_call.1} parent=63 // pred_region
          %569 = dma.done [#allocation13], 512
        $region92: #{tpu_custom_call.1} parent=63 // pred_fallthru
          _
        %s570 = sand.u32 %s67, 1
        %s571 = scalar_lea.sflag [#allocation4], %s570
        %s572 = sand.u32 %s67, 1
        %s573 = smul.addr %s572, 8
        %s574 = scalar_lea.vmem [#allocation3], %s573
        %p575 = pneg %p80
        %p576 = pneg %p77
        %s577 = sand.u32 %s38, 1
        %s578 = scalar_lea.sflag [#allocation7], %s577
        %s579 = sand.u32 %s93, 1
        %s580 = smul.addr %s579, 8
        %s581 = scalar_lea.vmem [#allocation6], %s580
        %p582 = pneg %p106
        %p583 = pneg %p103
        %s584 = sand.u32 %s38, 1
        %s585 = scalar_lea.sflag [#allocation7], %s584
        %s586 = sand.u32 %s119, 1
        %s587 = smul.addr %s586, 8
        %s588 = scalar_lea.vmem [#allocation8], %s587
        %p589 = pneg %p132
        %p590 = pneg %p129
        %p591 = pneg %p153
        %p592 = pneg %p150
        %p593 = pneg %p174
        %p594 = pneg %p171
        %p595 = pneg %p195
        %p596 = pneg %p192
        %p597 = pneg %p216
        %p598 = pneg %p213
        %p599 = scmp.lt.s32.totalorder %s45, 3
        %s600 = scalar_select %p599, %s45, 3
        %s601 = scalar_lea.vmem %s7, %s600
        %p602 = pneg %p242
        %p603 = pneg %p239
        %p604 = scmp.lt.s32.totalorder %s45, 3
        %s605 = scalar_select %p604, %s45, 3
        %s606 = scalar_lea.vmem %s8, %s605
        %p607 = pneg %p268
        %p608 = pneg %p265
        %p609 = scmp.lt.s32.totalorder %s45, 3
        %s610 = scalar_select %p609, %s45, 3
        %s611 = scalar_lea.vmem %s9, %s610
        %p612 = pneg %p294
        %p613 = pneg %p291
        %p614 = pneg %p315
        %p615 = pneg %p312
        %p616 = pneg %p343
        %p617 = pneg %p340
        %s618 = sand.u32 %s330, 1
        %s619 = scalar_lea.sflag [#allocation5], %s618
        %s620 = sand.u32 %s330, 1
        %s621 = smul.addr %s620, 8
        %s622 = scalar_lea.vmem [#allocation15], %s621
        %p623 = pneg %p373
        %p624 = pneg %p370
        %s625 = sand.u32 %s360, 1
        %s626 = scalar_lea.sflag [#allocation17], %s625
        %s627 = sand.u32 %s360, 1
        %s628 = smul.addr %s627, 8
        %s629 = scalar_lea.vmem [#allocation16], %s628
        %p630 = scmp.lt.s32.totalorder %s45, 3
        %s631 = scalar_select %p630, %s45, 3
        %s632 = scalar_lea.vmem %s7, %s631
        %p633 = scmp.lt.s32.totalorder %s45, 3
        %s634 = scalar_select %p633, %s45, 3
        %s635 = scalar_lea.vmem %s8, %s634
        %p636 = scmp.lt.s32.totalorder %s45, 3
        %s637 = scalar_select %p636, %s45, 3
        %s638 = scalar_lea.vmem %s9, %s637
        %s639 = smul.u32 %s45, 8
        %v640 = vld [vmem:[%s531] sm:$0xff]
        %v641 = vld [vmem:[%s540] sm:$0xff]
        %v642 = vld [vmem:[%s549] sm:$0xff]
        %s643 = scalar_lea.vmem [#allocation9], %s639
        %v644 = vld [vmem:[%s643] sm:$0xff]
        %s645 = scalar_lea.vmem [#allocation11], %s639
        %v646 = vld [vmem:[%s645] sm:$0xff]
        %s647 = scalar_lea.vmem [#allocation12], %s639
        %v648 = vld [vmem:[%s647] sm:$0xff]
        %v649 = vld [vmem:[%s632] sm:$0x1]
        %v651 = vlaneseq
        %v652 = vshrl.u32 %v651, 7
        %v653 = vsub.s32 0, %v652
        %v654 = vrot.slane %v649, %v653
        %vm656 = vcmask 261120
        %v658 = vsel %vm656, %v640, 0
        %v661 = vsel %vm656, %v644, 0
        %663 = vmatprep.subr.mxu0 0.0
        %664 = vmatpush1.xpose.msra.mxu0 0.0
        %665 = vmatprep.subr.mxu0 0.0
        %666 = vmatpush1.xpose.msra.mxu0 0.0
        %667 = vmatprep.subr.mxu0 0.0
        %668 = vmatpush1.xpose.msra.mxu0 0.0
        %669 = vmatprep.subr.mxu0 0.0
        %670 = vmatpush1.xpose.msra.mxu0 0.0
        %671 = vmatprep.subr.mxu0 0.0
        %672 = vmatpush1.xpose.msra.mxu0 0.0
        %673 = vmatprep.subr.mxu0 0.0
        %674 = vmatpush1.xpose.msra.mxu0 0.0
        %675 = vmatprep.subr.mxu0 0.0
        %676 = vmatpush1.xpose.msra.mxu0 0.0
        %677 = vmatprep.subr.mxu0 0.0
        %678 = vmatpush1.xpose.msra.mxu0 0.0
        %679 = vmatprep.subr.mxu0 0.0
        %680 = vmatpush1.xpose.msra.mxu0 0.0
        %681 = vmatprep.subr.mxu0 0.0
        %682 = vmatpush1.xpose.msra.mxu0 0.0
        %683 = vmatprep.subr.mxu0 0.0
        %684 = vmatpush1.xpose.msra.mxu0 0.0
        %685 = vmatprep.subr.mxu0 0.0
        %686 = vmatpush1.xpose.msra.mxu0 0.0
        %687 = vmatprep.subr.mxu0 0.0
        %688 = vmatpush1.xpose.msra.mxu0 0.0
        %689 = vmatprep.subr.mxu0 0.0
        %690 = vmatpush1.xpose.msra.mxu0 0.0
        %691 = vmatprep.subr.mxu0 0.0
        %692 = vmatpush1.xpose.msra.mxu0 0.0
        %693 = vmatprep.subr.mxu0 0.0
        %694 = vmatpush1.xpose.msra.mxu0 %v661
        %695 = vmatprep.subr.mxu0 0.0
        %696 = vmatpush2.xpose.msra.mxu0 0.0
        %697 = vmatprep.subr.mxu0 0.0
        %698 = vmatpush2.xpose.msra.mxu0 0.0
        %699 = vmatprep.subr.mxu0 0.0
        %700 = vmatpush2.xpose.msra.mxu0 0.0
        %701 = vmatprep.subr.mxu0 0.0
        %702 = vmatpush2.xpose.msra.mxu0 0.0
        %703 = vmatprep.subr.mxu0 0.0
        %704 = vmatpush2.xpose.msra.mxu0 0.0
        %705 = vmatprep.subr.mxu0 0.0
        %706 = vmatpush2.xpose.msra.mxu0 0.0
        %707 = vmatprep.subr.mxu0 0.0
        %708 = vmatpush2.xpose.msra.mxu0 0.0
        %709 = vmatprep.subr.mxu0 0.0
        %710 = vmatpush2.xpose.msra.mxu0 0.0
        %711 = vmatprep.subr.mxu0 0.0
        %712 = vmatpush2.xpose.msra.mxu0 0.0
        %713 = vmatprep.subr.mxu0 0.0
        %714 = vmatpush2.xpose.msra.mxu0 0.0
        %715 = vmatprep.subr.mxu0 0.0
        %716 = vmatpush2.xpose.msra.mxu0 0.0
        %717 = vmatprep.subr.mxu0 0.0
        %718 = vmatpush2.xpose.msra.mxu0 0.0
        %719 = vmatprep.subr.mxu0 0.0
        %720 = vmatpush2.xpose.msra.mxu0 0.0
        %721 = vmatprep.subr.mxu0 0.0
        %722 = vmatpush2.xpose.msra.mxu0 0.0
        %723 = vmatprep.subr.mxu0 0.0
        %724 = vmatpush2.xpose.msra.mxu0 0.0
        %725 = vmatprep.subr.mxu0 0.0
        %726 = vmatpush2.xpose.msra.mxu0 0.0
        %727 = vmatprep.mubr.f32.mxu0 0.0
        %728 = vmatmul.mubr.f32.gmra.mxu0 %v658
        %v729 = vpop.f32.mrf.mxu0
        %v730 = vadd.f32 %v654, %v729
        %v731 = vpop.f32.mrf.mxu0
        %732 = vdwg.mxu0
        %v733 = vld [vmem:[%s635] sm:$0x1]
        %v735 = vlaneseq
        %v736 = vshrl.u32 %v735, 7
        %v737 = vsub.s32 0, %v736
        %v738 = vrot.slane %v733, %v737
        %v741 = vsel %vm656, %v641, 0
        %v744 = vsel %vm656, %v646, 0
        %746 = vmatprep.subr.mxu0 0.0
        %747 = vmatpush1.xpose.msra.mxu0 0.0
        %748 = vmatprep.subr.mxu0 0.0
        %749 = vmatpush1.xpose.msra.mxu0 0.0
        %750 = vmatprep.subr.mxu0 0.0
        %751 = vmatpush1.xpose.msra.mxu0 0.0
        %752 = vmatprep.subr.mxu0 0.0
        %753 = vmatpush1.xpose.msra.mxu0 0.0
        %754 = vmatprep.subr.mxu0 0.0
        %755 = vmatpush1.xpose.msra.mxu0 0.0
        %756 = vmatprep.subr.mxu0 0.0
        %757 = vmatpush1.xpose.msra.mxu0 0.0
        %758 = vmatprep.subr.mxu0 0.0
        %759 = vmatpush1.xpose.msra.mxu0 0.0
        %760 = vmatprep.subr.mxu0 0.0
        %761 = vmatpush1.xpose.msra.mxu0 0.0
        %762 = vmatprep.subr.mxu0 0.0
        %763 = vmatpush1.xpose.msra.mxu0 0.0
        %764 = vmatprep.subr.mxu0 0.0
        %765 = vmatpush1.xpose.msra.mxu0 0.0
        %766 = vmatprep.subr.mxu0 0.0
        %767 = vmatpush1.xpose.msra.mxu0 0.0
        %768 = vmatprep.subr.mxu0 0.0
        %769 = vmatpush1.xpose.msra.mxu0 0.0
        %770 = vmatprep.subr.mxu0 0.0
        %771 = vmatpush1.xpose.msra.mxu0 0.0
        %772 = vmatprep.subr.mxu0 0.0
        %773 = vmatpush1.xpose.msra.mxu0 0.0
        %774 = vmatprep.subr.mxu0 0.0
        %775 = vmatpush1.xpose.msra.mxu0 0.0
        %776 = vmatprep.subr.mxu0 0.0
        %777 = vmatpush1.xpose.msra.mxu0 %v744
        %778 = vmatprep.subr.mxu0 0.0
        %779 = vmatpush2.xpose.msra.mxu0 0.0
        %780 = vmatprep.subr.mxu0 0.0
        %781 = vmatpush2.xpose.msra.mxu0 0.0
        %782 = vmatprep.subr.mxu0 0.0
        %783 = vmatpush2.xpose.msra.mxu0 0.0
        %784 = vmatprep.subr.mxu0 0.0
        %785 = vmatpush2.xpose.msra.mxu0 0.0
        %786 = vmatprep.subr.mxu0 0.0
        %787 = vmatpush2.xpose.msra.mxu0 0.0
        %788 = vmatprep.subr.mxu0 0.0
        %789 = vmatpush2.xpose.msra.mxu0 0.0
        %790 = vmatprep.subr.mxu0 0.0
        %791 = vmatpush2.xpose.msra.mxu0 0.0
        %792 = vmatprep.subr.mxu0 0.0
        %793 = vmatpush2.xpose.msra.mxu0 0.0
        %794 = vmatprep.subr.mxu0 0.0
        %795 = vmatpush2.xpose.msra.mxu0 0.0
        %796 = vmatprep.subr.mxu0 0.0
        %797 = vmatpush2.xpose.msra.mxu0 0.0
        %798 = vmatprep.subr.mxu0 0.0
        %799 = vmatpush2.xpose.msra.mxu0 0.0
        %800 = vmatprep.subr.mxu0 0.0
        %801 = vmatpush2.xpose.msra.mxu0 0.0
        %802 = vmatprep.subr.mxu0 0.0
        %803 = vmatpush2.xpose.msra.mxu0 0.0
        %804 = vmatprep.subr.mxu0 0.0
        %805 = vmatpush2.xpose.msra.mxu0 0.0
        %806 = vmatprep.subr.mxu0 0.0
        %807 = vmatpush2.xpose.msra.mxu0 0.0
        %808 = vmatprep.subr.mxu0 0.0
        %809 = vmatpush2.xpose.msra.mxu0 0.0
        %810 = vmatprep.mubr.f32.mxu0 0.0
        %811 = vmatmul.mubr.f32.gmra.mxu0 %v741
        %v812 = vpop.f32.mrf.mxu0
        %v813 = vadd.f32 %v738, %v812
        %v814 = vpop.f32.mrf.mxu0
        %815 = vdwg.mxu0
        %v816 = vld [vmem:[%s638] sm:$0x1]
        %v818 = vlaneseq
        %v819 = vshrl.u32 %v818, 7
        %v820 = vsub.s32 0, %v819
        %v821 = vrot.slane %v816, %v820
        %v824 = vsel %vm656, %v642, 0
        %v827 = vsel %vm656, %v648, 0
        %829 = vmatprep.subr.mxu0 0.0
        %830 = vmatpush1.xpose.msra.mxu0 0.0
        %831 = vmatprep.subr.mxu0 0.0
        %832 = vmatpush1.xpose.msra.mxu0 0.0
        %833 = vmatprep.subr.mxu0 0.0
        %834 = vmatpush1.xpose.msra.mxu0 0.0
        %835 = vmatprep.subr.mxu0 0.0
        %836 = vmatpush1.xpose.msra.mxu0 0.0
        %837 = vmatprep.subr.mxu0 0.0
        %838 = vmatpush1.xpose.msra.mxu0 0.0
        %839 = vmatprep.subr.mxu0 0.0
        %840 = vmatpush1.xpose.msra.mxu0 0.0
        %841 = vmatprep.subr.mxu0 0.0
        %842 = vmatpush1.xpose.msra.mxu0 0.0
        %843 = vmatprep.subr.mxu0 0.0
        %844 = vmatpush1.xpose.msra.mxu0 0.0
        %845 = vmatprep.subr.mxu0 0.0
        %846 = vmatpush1.xpose.msra.mxu0 0.0
        %847 = vmatprep.subr.mxu0 0.0
        %848 = vmatpush1.xpose.msra.mxu0 0.0
        %849 = vmatprep.subr.mxu0 0.0
        %850 = vmatpush1.xpose.msra.mxu0 0.0
        %851 = vmatprep.subr.mxu0 0.0
        %852 = vmatpush1.xpose.msra.mxu0 0.0
        %853 = vmatprep.subr.mxu0 0.0
        %854 = vmatpush1.xpose.msra.mxu0 0.0
        %855 = vmatprep.subr.mxu0 0.0
        %856 = vmatpush1.xpose.msra.mxu0 0.0
        %857 = vmatprep.subr.mxu0 0.0
        %858 = vmatpush1.xpose.msra.mxu0 0.0
        %859 = vmatprep.subr.mxu0 0.0
        %860 = vmatpush1.xpose.msra.mxu0 %v827
        %861 = vmatprep.subr.mxu0 0.0
        %862 = vmatpush2.xpose.msra.mxu0 0.0
        %863 = vmatprep.subr.mxu0 0.0
        %864 = vmatpush2.xpose.msra.mxu0 0.0
        %865 = vmatprep.subr.mxu0 0.0
        %866 = vmatpush2.xpose.msra.mxu0 0.0
        %867 = vmatprep.subr.mxu0 0.0
        %868 = vmatpush2.xpose.msra.mxu0 0.0
        %869 = vmatprep.subr.mxu0 0.0
        %870 = vmatpush2.xpose.msra.mxu0 0.0
        %871 = vmatprep.subr.mxu0 0.0
        %872 = vmatpush2.xpose.msra.mxu0 0.0
        %873 = vmatprep.subr.mxu0 0.0
        %874 = vmatpush2.xpose.msra.mxu0 0.0
        %875 = vmatprep.subr.mxu0 0.0
        %876 = vmatpush2.xpose.msra.mxu0 0.0
        %877 = vmatprep.subr.mxu0 0.0
        %878 = vmatpush2.xpose.msra.mxu0 0.0
        %879 = vmatprep.subr.mxu0 0.0
        %880 = vmatpush2.xpose.msra.mxu0 0.0
        %881 = vmatprep.subr.mxu0 0.0
        %882 = vmatpush2.xpose.msra.mxu0 0.0
        %883 = vmatprep.subr.mxu0 0.0
        %884 = vmatpush2.xpose.msra.mxu0 0.0
        %885 = vmatprep.subr.mxu0 0.0
        %886 = vmatpush2.xpose.msra.mxu0 0.0
        %887 = vmatprep.subr.mxu0 0.0
        %888 = vmatpush2.xpose.msra.mxu0 0.0
        %889 = vmatprep.subr.mxu0 0.0
        %890 = vmatpush2.xpose.msra.mxu0 0.0
        %891 = vmatprep.subr.mxu0 0.0
        %892 = vmatpush2.xpose.msra.mxu0 0.0
        %893 = vmatprep.mubr.f32.mxu0 0.0
        %894 = vmatmul.mubr.f32.gmra.mxu0 %v824
        %v895 = vpop.f32.mrf.mxu0
        %v896 = vadd.f32 %v821, %v895
        %v897 = vpop.f32.mrf.mxu0
        %898 = vdwg.mxu0
        %v899 = vmul.f32 %v730, 0.35355338
        %vm900 = vcmask 64512
        %v902 = vsel %vm900, %v899, 0
        %v905 = vsel %vm900, %v813, 0
        %907 = vmatprep.subr.mxu0 0.0
        %908 = vmatpush1.xpose.msra.mxu0 0.0
        %909 = vmatprep.subr.mxu0 0.0
        %910 = vmatpush1.xpose.msra.mxu0 0.0
        %911 = vmatprep.subr.mxu0 0.0
        %912 = vmatpush1.xpose.msra.mxu0 0.0
        %913 = vmatprep.subr.mxu0 0.0
        %914 = vmatpush1.xpose.msra.mxu0 0.0
        %915 = vmatprep.subr.mxu0 0.0
        %916 = vmatpush1.xpose.msra.mxu0 0.0
        %917 = vmatprep.subr.mxu0 0.0
        %918 = vmatpush1.xpose.msra.mxu0 0.0
        %919 = vmatprep.subr.mxu0 0.0
        %920 = vmatpush1.xpose.msra.mxu0 0.0
        %921 = vmatprep.subr.mxu0 0.0
        %922 = vmatpush1.xpose.msra.mxu0 0.0
        %923 = vmatprep.subr.mxu0 0.0
        %924 = vmatpush1.xpose.msra.mxu0 0.0
        %925 = vmatprep.subr.mxu0 0.0
        %926 = vmatpush1.xpose.msra.mxu0 0.0
        %927 = vmatprep.subr.mxu0 0.0
        %928 = vmatpush1.xpose.msra.mxu0 0.0
        %929 = vmatprep.subr.mxu0 0.0
        %930 = vmatpush1.xpose.msra.mxu0 0.0
        %931 = vmatprep.subr.mxu0 0.0
        %932 = vmatpush1.xpose.msra.mxu0 0.0
        %933 = vmatprep.subr.mxu0 0.0
        %934 = vmatpush1.xpose.msra.mxu0 0.0
        %935 = vmatprep.subr.mxu0 0.0
        %936 = vmatpush1.xpose.msra.mxu0 0.0
        %937 = vmatprep.subr.mxu0 0.0
        %938 = vmatpush1.xpose.msra.mxu0 %v905
        %939 = vmatprep.subr.mxu0 0.0
        %940 = vmatpush2.xpose.msra.mxu0 0.0
        %941 = vmatprep.subr.mxu0 0.0
        %942 = vmatpush2.xpose.msra.mxu0 0.0
        %943 = vmatprep.subr.mxu0 0.0
        %944 = vmatpush2.xpose.msra.mxu0 0.0
        %945 = vmatprep.subr.mxu0 0.0
        %946 = vmatpush2.xpose.msra.mxu0 0.0
        %947 = vmatprep.subr.mxu0 0.0
        %948 = vmatpush2.xpose.msra.mxu0 0.0
        %949 = vmatprep.subr.mxu0 0.0
        %950 = vmatpush2.xpose.msra.mxu0 0.0
        %951 = vmatprep.subr.mxu0 0.0
        %952 = vmatpush2.xpose.msra.mxu0 0.0
        %953 = vmatprep.subr.mxu0 0.0
        %954 = vmatpush2.xpose.msra.mxu0 0.0
        %955 = vmatprep.subr.mxu0 0.0
        %956 = vmatpush2.xpose.msra.mxu0 0.0
        %957 = vmatprep.subr.mxu0 0.0
        %958 = vmatpush2.xpose.msra.mxu0 0.0
        %959 = vmatprep.subr.mxu0 0.0
        %960 = vmatpush2.xpose.msra.mxu0 0.0
        %961 = vmatprep.subr.mxu0 0.0
        %962 = vmatpush2.xpose.msra.mxu0 0.0
        %963 = vmatprep.subr.mxu0 0.0
        %964 = vmatpush2.xpose.msra.mxu0 0.0
        %965 = vmatprep.subr.mxu0 0.0
        %966 = vmatpush2.xpose.msra.mxu0 0.0
        %967 = vmatprep.subr.mxu0 0.0
        %968 = vmatpush2.xpose.msra.mxu0 0.0
        %969 = vmatprep.subr.mxu0 0.0
        %970 = vmatpush2.xpose.msra.mxu0 0.0
        %971 = vmatprep.mubr.f32.mxu0 0.0
        %972 = vmatmul.mubr.f32.gmra.mxu0 %v902
        %v973 = vpop.f32.mrf.mxu0
        %v974 = vadd.f32 0.0, %v973
        %v975 = vpop.f32.mrf.mxu0
        %976 = vdwg.mxu0
        %v977 = vsel %vm900, %v974, -inf
        %978 = vmax.xlane.f32.xlu0 %v977
        %v979 = vpop.xlane.xlu0 %978
        %v980 = vsub.f32 %v974, %v979
        %v981 = vmul.f32 %v980, 1.442695
        %v982 = vpow.pop %v981
        %v983 = vsel %vm900, %v982, 0.0
        %984 = vadd.xlane.f32.xlu0 %v983
        %v985 = vpop.xlane.xlu0 %984
        %v986 = vrcp.pop %v985
        %v987 = vmul.f32 %v985, %v986
        %v988 = vsub.f32 2.0, %v987
        %v989 = vmul.f32 %v986, %v988
        %v990 = vmul.f32 %v985, %v989
        %v991 = vsub.f32 2.0, %v990
        %v992 = vmul.f32 %v989, %v991
        %v993 = vmul.f32 %v982, %v992
        %994 = vst.msk [vmem:[%s629] sm:$0xff] %vm900, %v993
        %v996 = vsel %vm900, %v993, 0
        %998 = vmatprep.subr.mxu0 0.0
        %999 = vmatpush1.msra.mxu0 0.0
        %1000 = vmatprep.subr.mxu0 0.0
        %1001 = vmatpush1.msra.mxu0 0.0
        %1002 = vmatprep.subr.mxu0 0.0
        %1003 = vmatpush1.msra.mxu0 0.0
        %1004 = vmatprep.subr.mxu0 0.0
        %1005 = vmatpush1.msra.mxu0 0.0
        %1006 = vmatprep.subr.mxu0 0.0
        %1007 = vmatpush1.msra.mxu0 0.0
        %1008 = vmatprep.subr.mxu0 0.0
        %1009 = vmatpush1.msra.mxu0 0.0
        %1010 = vmatprep.subr.mxu0 0.0
        %1011 = vmatpush1.msra.mxu0 0.0
        %1012 = vmatprep.subr.mxu0 0.0
        %1013 = vmatpush1.msra.mxu0 0.0
        %1014 = vmatprep.subr.mxu0 0.0
        %1015 = vmatpush1.msra.mxu0 0.0
        %1016 = vmatprep.subr.mxu0 0.0
        %1017 = vmatpush1.msra.mxu0 0.0
        %1018 = vmatprep.subr.mxu0 0.0
        %1019 = vmatpush1.msra.mxu0 0.0
        %1020 = vmatprep.subr.mxu0 0.0
        %1021 = vmatpush1.msra.mxu0 0.0
        %1022 = vmatprep.subr.mxu0 0.0
        %1023 = vmatpush1.msra.mxu0 0.0
        %1024 = vmatprep.subr.mxu0 0.0
        %1025 = vmatpush1.msra.mxu0 0.0
        %1026 = vmatprep.subr.mxu0 0.0
        %1027 = vmatpush1.msra.mxu0 0.0
        %1028 = vmatprep.subr.mxu0 0.0
        %1029 = vmatpush1.msra.mxu0 %v896
        %1030 = vmatprep.subr.mxu0 0.0
        %1031 = vmatpush2.msra.mxu0 0.0
        %1032 = vmatprep.subr.mxu0 0.0
        %1033 = vmatpush2.msra.mxu0 0.0
        %1034 = vmatprep.subr.mxu0 0.0
        %1035 = vmatpush2.msra.mxu0 0.0
        %1036 = vmatprep.subr.mxu0 0.0
        %1037 = vmatpush2.msra.mxu0 0.0
        %1038 = vmatprep.subr.mxu0 0.0
        %1039 = vmatpush2.msra.mxu0 0.0
        %1040 = vmatprep.subr.mxu0 0.0
        %1041 = vmatpush2.msra.mxu0 0.0
        %1042 = vmatprep.subr.mxu0 0.0
        %1043 = vmatpush2.msra.mxu0 0.0
        %1044 = vmatprep.subr.mxu0 0.0
        %1045 = vmatpush2.msra.mxu0 0.0
        %1046 = vmatprep.subr.mxu0 0.0
        %1047 = vmatpush2.msra.mxu0 0.0
        %1048 = vmatprep.subr.mxu0 0.0
        %1049 = vmatpush2.msra.mxu0 0.0
        %1050 = vmatprep.subr.mxu0 0.0
        %1051 = vmatpush2.msra.mxu0 0.0
        %1052 = vmatprep.subr.mxu0 0.0
        %1053 = vmatpush2.msra.mxu0 0.0
        %1054 = vmatprep.subr.mxu0 0.0
        %1055 = vmatpush2.msra.mxu0 0.0
        %1056 = vmatprep.subr.mxu0 0.0
        %1057 = vmatpush2.msra.mxu0 0.0
        %1058 = vmatprep.subr.mxu0 0.0
        %1059 = vmatpush2.msra.mxu0 0.0
        %1060 = vmatprep.subr.mxu0 0.0
        %1061 = vmatpush2.msra.mxu0 0.0
        %1062 = vmatprep.mubr.f32.mxu0 0.0
        %1063 = vmatmul.mubr.f32.gmra.mxu0 %v996
        %v1064 = vpop.f32.mrf.mxu0
        %v1065 = vadd.f32 0.0, %v1064
        %v1066 = vpop.f32.mrf.mxu0
        %1067 = vdwg.mxu0
        %s1068 = scalar_lea.vmem [#allocation14], %s639
        %v1069 = vld [vmem:[%s1068] sm:$0xff]
        %p1070 = scmp.eq.s32.totalorder %s45, 0
        // Predicated region
        $region93: #{tpu_custom_call.1} parent=63 // pred_check
          %p1071 = pneg %p1070
        $region94: #{tpu_custom_call.1} parent=63 // pred_check_branch
          %1073 = sbr.rel (%p1071) target = $region96
        $region95: #{tpu_custom_call.1} parent=63 // pred_region
          %1074 = vst.msk [vmem:[#allocation2] sm:$0xff] %vm656, 0.0
        $region96: #{tpu_custom_call.1} parent=63 // pred_fallthru
          _
        %v1075 = vld [vmem:[#allocation2] sm:$0xff]
        %v1077 = vsel %vm900, %v1065, 0
        %1079 = vmatprep.subr.mxu0 0.0
        %1080 = vmatpush1.msra.mxu0 0.0
        %1081 = vmatprep.subr.mxu0 0.0
        %1082 = vmatpush1.msra.mxu0 0.0
        %1083 = vmatprep.subr.mxu0 0.0
        %1084 = vmatpush1.msra.mxu0 0.0
        %1085 = vmatprep.subr.mxu0 0.0
        %1086 = vmatpush1.msra.mxu0 0.0
        %1087 = vmatprep.subr.mxu0 0.0
        %1088 = vmatpush1.msra.mxu0 0.0
        %1089 = vmatprep.subr.mxu0 0.0
        %1090 = vmatpush1.msra.mxu0 0.0
        %1091 = vmatprep.subr.mxu0 0.0
        %1092 = vmatpush1.msra.mxu0 0.0
        %1093 = vmatprep.subr.mxu0 0.0
        %1094 = vmatpush1.msra.mxu0 0.0
        %1095 = vmatprep.subr.mxu0 0.0
        %1096 = vmatpush1.msra.mxu0 0.0
        %1097 = vmatprep.subr.mxu0 0.0
        %1098 = vmatpush1.msra.mxu0 0.0
        %1099 = vmatprep.subr.mxu0 0.0
        %1100 = vmatpush1.msra.mxu0 0.0
        %1101 = vmatprep.subr.mxu0 0.0
        %1102 = vmatpush1.msra.mxu0 0.0
        %1103 = vmatprep.subr.mxu0 0.0
        %1104 = vmatpush1.msra.mxu0 0.0
        %1105 = vmatprep.subr.mxu0 0.0
        %1106 = vmatpush1.msra.mxu0 0.0
        %1107 = vmatprep.subr.mxu0 0.0
        %1108 = vmatpush1.msra.mxu0 0.0
        %1109 = vmatprep.subr.mxu0 0.0
        %1110 = vmatpush1.msra.mxu0 %v1069
        %1111 = vmatprep.subr.mxu0 0.0
        %1112 = vmatpush2.msra.mxu0 0.0
        %1113 = vmatprep.subr.mxu0 0.0
        %1114 = vmatpush2.msra.mxu0 0.0
        %1115 = vmatprep.subr.mxu0 0.0
        %1116 = vmatpush2.msra.mxu0 0.0
        %1117 = vmatprep.subr.mxu0 0.0
        %1118 = vmatpush2.msra.mxu0 0.0
        %1119 = vmatprep.subr.mxu0 0.0
        %1120 = vmatpush2.msra.mxu0 0.0
        %1121 = vmatprep.subr.mxu0 0.0
        %1122 = vmatpush2.msra.mxu0 0.0
        %1123 = vmatprep.subr.mxu0 0.0
        %1124 = vmatpush2.msra.mxu0 0.0
        %1125 = vmatprep.subr.mxu0 0.0
        %1126 = vmatpush2.msra.mxu0 0.0
        %1127 = vmatprep.subr.mxu0 0.0
        %1128 = vmatpush2.msra.mxu0 0.0
        %1129 = vmatprep.subr.mxu0 0.0
        %1130 = vmatpush2.msra.mxu0 0.0
        %1131 = vmatprep.subr.mxu0 0.0
        %1132 = vmatpush2.msra.mxu0 0.0
        %1133 = vmatprep.subr.mxu0 0.0
        %1134 = vmatpush2.msra.mxu0 0.0
        %1135 = vmatprep.subr.mxu0 0.0
        %1136 = vmatpush2.msra.mxu0 0.0
        %1137 = vmatprep.subr.mxu0 0.0
        %1138 = vmatpush2.msra.mxu0 0.0
        %1139 = vmatprep.subr.mxu0 0.0
        %1140 = vmatpush2.msra.mxu0 0.0
        %1141 = vmatprep.subr.mxu0 0.0
        %1142 = vmatpush2.msra.mxu0 0.0
        %1143 = vmatprep.mubr.f32.mxu0 0.0
        %1144 = vmatmul.mubr.f32.gmra.mxu0 %v1077
        %v1145 = vpop.f32.mrf.mxu0
        %v1146 = vadd.f32 0.0, %v1145
        %v1147 = vpop.f32.mrf.mxu0
        %1148 = vdwg.mxu0
        %v1149 = vadd.f32 %v1075, %v1146
        %1150 = vst.msk [vmem:[#allocation2] sm:$0xff] %vm656, %v1149
        %p1151 = scmp.eq.s32.totalorder %s45, 3
        // Predicated region
        $region97: #{tpu_custom_call.1} parent=63 // pred_check
          %p1152 = pneg %p1151
        $region98: #{tpu_custom_call.1} parent=63 // pred_check_branch
          %1154 = sbr.rel (%p1152) target = $region100
        $region99: #{tpu_custom_call.1} parent=63 // pred_region
          %v1155 = vld [vmem:[#allocation2] sm:$0xff]
          %v1156 = vld [vmem:[%s10] sm:$0x1]
          %v1158 = vlaneseq
          %v1159 = vshrl.u32 %v1158, 7
          %v1160 = vsub.s32 0, %v1159
          %v1161 = vrot.slane %v1156, %v1160
          %v1163 = vadd.f32 %v1155, %v1161
          %1164 = vst.msk [vmem:[%s622] sm:$0xff] %vm656, %v1163
        $region100: #{tpu_custom_call.1} parent=63 // pred_fallthru
          _
        %s1165 = sand.u32 %s330, 1
        %s1166 = scalar_lea.sflag [#allocation5], %s1165
        %s1167 = sand.u32 %s330, 1
        %s1168 = smul.addr %s1167, 8
        %s1169 = scalar_lea.vmem [#allocation15], %s1168
        %s1170 = sand.u32 %s360, 1
        %s1171 = scalar_lea.sflag [#allocation17], %s1170
        %s1172 = sand.u32 %s360, 1
        %s1173 = smul.addr %s1172, 8
        %s1174 = scalar_lea.vmem [#allocation16], %s1173
        // Predicated region
        $region101: #{tpu_custom_call.1} parent=63 // pred_check
          %p1175 = pneg %p340
        $region102: #{tpu_custom_call.1} parent=63 // pred_check_branch
          %1177 = sbr.rel (%p1175) target = $region104
        $region103: #{tpu_custom_call.1} parent=63 // pred_region
          %s1179 = ssub.s32 128, 128
          %1180 = vsyncadd %s1166, %s1179
          %s1181 = sadd.s32 %s44, %s43
          %s1182 = smul.addr %s1181, 128
          %s1183 = scalar_lea.hbm %s11, %s1182
          %s1185 = sshll.u32 %s1169, 4
          %s1186 = int_to_ptr.vmem [resolvable:$true] %s1185
          %1188 = dma.vmem_to_hbm [thread:$0]  %s1186, 128, %s1183, %s1166
        $region104: #{tpu_custom_call.1} parent=63 // pred_fallthru
          _
        // Predicated region
        $region105: #{tpu_custom_call.1} parent=63 // pred_check
          %p1189 = pneg %p370
        $region106: #{tpu_custom_call.1} parent=63 // pred_check_branch
          %1191 = sbr.rel (%p1189) target = $region108
        $region107: #{tpu_custom_call.1} parent=63 // pred_region
          %s1193 = ssub.s32 128, 128
          %1194 = vsyncadd %s1171, %s1193
          %s1195 = sadd.s32 %s44, %s45
          %s1196 = smul.addr %s43, 4
          %s1197 = sadd.s32 %s1195, %s1196
          %s1198 = smul.addr %s1197, 128
          %s1199 = scalar_lea.hbm %s12, %s1198
          %s1201 = sshll.u32 %s1174, 4
          %s1202 = int_to_ptr.vmem [resolvable:$true] %s1201
          %1204 = dma.vmem_to_hbm [thread:$0]  %s1202, 128, %s1199, %s1171
        $region108: #{tpu_custom_call.1} parent=63 // pred_fallthru
          _
      $region64: #{tpu_custom_call.1} parent=5 // pred_fallthru
        _
      %p1205 = scmp.le.s32.totalorder 2, %s33
      // Predicated region
      $region109: #{tpu_custom_call.1} parent=5 // pred_check
        %p1206 = pneg %p1205
      $region110: #{tpu_custom_call.1} parent=5 // pred_check_branch
        %1208 = sbr.rel (%p1206) target = $region112
      $region111: #{tpu_custom_call.1} parent=5 // pred_region
        %s1209 = ssub.s32 %s33, 2
        // Predicated region
        $region113: #{tpu_custom_call.1} parent=111 // pred_check
          %p1210 = pneg %p346
        $region114: #{tpu_custom_call.1} parent=111 // pred_check_branch
          %1212 = sbr.rel (%p1210) target = $region116
        $region115: #{tpu_custom_call.1} parent=111 // pred_region
          %s1213 = sand.u32 %s331, 1
          %s1214 = scalar_lea.sflag [#allocation5], %s1213
          %s1215 = sand.u32 %s331, 1
          %s1216 = smul.addr %s1215, 8
          %s1217 = scalar_lea.vmem [#allocation15], %s1216
          %1218 = dma.done %s1214, 128
        $region116: #{tpu_custom_call.1} parent=111 // pred_fallthru
          _
        // Predicated region
        $region117: #{tpu_custom_call.1} parent=111 // pred_check
          %p1219 = pneg %p376
        $region118: #{tpu_custom_call.1} parent=111 // pred_check_branch
          %1221 = sbr.rel (%p1219) target = $region120
        $region119: #{tpu_custom_call.1} parent=111 // pred_region
          %s1222 = sand.u32 %s361, 1
          %s1223 = scalar_lea.sflag [#allocation17], %s1222
          %s1224 = sand.u32 %s361, 1
          %s1225 = smul.addr %s1224, 8
          %s1226 = scalar_lea.vmem [#allocation16], %s1225
          %1227 = dma.done %s1223, 128
        $region120: #{tpu_custom_call.1} parent=111 // pred_fallthru
          _
      $region112: #{tpu_custom_call.1} parent=5 // pred_fallthru
        _
    $region6: #{tpu_custom_call.1} parent=1 // loop_footer
      %s37 = sadd.s32 1, %s33
    $region7: #{tpu_custom_call.1} parent=1 // loop_footer_branch
      %32 = sbr.rel target = $region3
    $region8: #{tpu_custom_call.1} parent=1 // loop_exit
      _
    %1228 = vsyncpa [#allocation4], 1
    %s1229 = scalar_lea.sflag [#allocation4], 1
    %1230 = vsyncpa %s1229, 1
    %1231 = vsyncpa [#allocation7], 1
    %s1232 = scalar_lea.sflag [#allocation7], 1
    %1233 = vsyncpa %s1232, 1
    %1234 = vsyncpa [#allocation10], 1
    %1235 = vsyncpa [#allocation13], 1
    %1236 = vsyncpa [#allocation5], 1
    %s1237 = scalar_lea.sflag [#allocation5], 1
    %1238 = vsyncpa %s1237, 1
    %1239 = vsyncpa [#allocation17], 1
    %s1240 = scalar_lea.sflag [#allocation17], 1
    %1241 = vsyncpa %s1240, 1

</llo_original>
